<compile_context>
chip_gen: v5e
topology: v5e:2x2
jax: 0.10.0
libtpu: 0.0.40
codegen_flags: <defaults>
</compile_context>

<pallas_src>
import functools

import jax
import jax.numpy as jnp
from jax.experimental import pallas as pl
from jax.experimental.pallas import tpu as pltpu

IN_F = 28 * 28      # 784
H = 512
OUT_F = 10
OUT_PAD = 128       # lane-dense output width (zero-padded columns 10..127)


def _round_up(x, m):
    return ((x + m - 1) // m) * m


def mlp_kernel(x_ref, w1_ref, b1_ref, w2_ref, b2_ref, w3_ref, b3_ref, o_ref):
    # One batch tile per grid step: f32 x arrives straight from HBM, is cast to
    # bf16 on the VPU, then 3 MXU matmuls (bf16 in, f32 accumulate) with f32
    # bias-add / ReLU. Weights/biases are VMEM-resident across grid steps.
    x = x_ref[...].astype(jnp.bfloat16)                          # (TB, 784)

    h1 = jnp.dot(x, w1_ref[...], preferred_element_type=jnp.float32) + b1_ref[...]
    h1 = jnp.maximum(h1, 0.0)

    h2 = jnp.dot(h1.astype(jnp.bfloat16), w2_ref[...],
                 preferred_element_type=jnp.float32) + b2_ref[...]
    h2 = jnp.maximum(h2, 0.0)

    logits = jnp.dot(h2.astype(jnp.bfloat16), w3_ref[...],
                     preferred_element_type=jnp.float32) + b3_ref[...]
    o_ref[...] = logits.astype(o_ref.dtype)                      # (TB, 128) bf16


def init_params(key):
    """f32 params mimicking nn.Linear default init: U(-1/sqrt(fan_in), +1/sqrt(fan_in)).
    Weights are stored transposed: (in_features, out_features)."""
    def linear(key, fan_in, fan_out):
        kw, kb = jax.random.split(key)
        bound = 1.0 / jnp.sqrt(fan_in)
        w_t = jax.random.uniform(kw, (fan_in, fan_out), jnp.float32, -bound, bound)
        b = jax.random.uniform(kb, (1, fan_out), jnp.float32, -bound, bound)
        return w_t, b

    k1, k2, k3 = jax.random.split(key, 3)
    w1, b1 = linear(k1, IN_F, H)
    w2, b2 = linear(k2, H, H)
    w3, b3 = linear(k3, H, OUT_F)
    return (w1, b1, w2, b2, w3, b3)


def prepare_params(params):
    """One-time cast/pad for the kernel:
       W1 (784,512) bf16, W2 (512,512) bf16,
       W3 -> (512,128) bf16 / b3 -> (1,128) f32 (zero cols 10:128).
       Biases stay f32 (bias-add happens in f32)."""
    w1, b1, w2, b2, w3, b3 = params
    w3p = jnp.zeros((H, OUT_PAD), jnp.bfloat16).at[:, :OUT_F].set(w3.astype(jnp.bfloat16))
    b3p = jnp.zeros((1, OUT_PAD), jnp.float32).at[:, :OUT_F].set(b3)
    return (w1.astype(jnp.bfloat16), b1, w2.astype(jnp.bfloat16), b2, w3p, b3p)


@functools.partial(jax.jit, static_argnames=("block_b",))
def neural_network_forward(x, prepped_params, block_b=None):
    """x: (N, 28, 28) float32. Returns logits (N, 10) float32."""
    w1, b1, w2, b2, w3, b3 = prepped_params
    n = x.shape[0]
    x_flat = x.reshape(n, IN_F)          # nn.Flatten(); stays f32, no HBM pad pass

    # Batch-tile selection:
    #   * default tile 512 rows (1024 for very large batches),
    #   * >=2 grid steps when possible so v7x's two TensorCores both get work,
    #   * tiles load-balanced and rounded to a multiple of 16 (bf16 output
    #     blocks must start on a (16,128) tile boundary); no HBM batch padding —
    #     the ragged last tile is handled by Pallas's masked block writeback.
    if block_b is None:
        block_b = 1024 if n >= 2048 else 512
    num_tiles = pl.cdiv(n, block_b)
    if num_tiles == 1 and n >= 16:
        num_tiles = 2
    tb = _round_up(pl.cdiv(n, num_tiles), 16)
    num_tiles = pl.cdiv(n, tb)

    # Weights/biases: constant block index (VMEM-resident across grid steps),
    # single-buffered (block never changes -> no second pipeline buffer).
    const = lambda shape: pl.BlockSpec(shape, lambda i: (0,) * len(shape),
                                       pipeline_mode=pl.Buffered(1))

    out = pl.pallas_call(
        mlp_kernel,
        out_shape=jax.ShapeDtypeStruct((n, OUT_PAD), jnp.bfloat16),
        grid_spec=pltpu.PrefetchScalarGridSpec(
            num_scalar_prefetch=0,
            grid=(num_tiles,),
            in_specs=[
                pl.BlockSpec((tb, IN_F), lambda i: (i, 0)),  # x tile (f32, pipelined)
                const((IN_F, H)),      # W1 (bf16)
                const((1, H)),         # b1 (f32)
                const((H, H)),         # W2 (bf16)
                const((1, H)),         # b2 (f32)
                const((H, OUT_PAD)),   # W3 (bf16, lane-padded)
                const((1, OUT_PAD)),   # b3 (f32, lane-padded)
            ],
            out_specs=pl.BlockSpec((tb, OUT_PAD), lambda i: (i, 0)),
        ),
        compiler_params=pltpu.CompilerParams(
            # independent batch tiles -> shard across both TCs on v7x
            dimension_semantics=("parallel",),
            vmem_limit_bytes=32 * 1024 * 1024,
        ),
    )(x_flat, w1, b1, w2, b2, w3, b3)

    return out[:, :OUT_F].astype(jnp.float32)


def reference_forward_f32(x, params):
    """Full-f32 pure-JAX reference (exact PyTorch-module semantics)."""
    w1, b1, w2, b2, w3, b3 = params
    h = x.reshape(x.shape[0], IN_F)
    h = jnp.maximum(h @ w1 + b1, 0.0)
    h = jnp.maximum(h @ w2 + b2, 0.0)
    return h @ w3 + b3


def reference_forward_bf16(x, params):
    """Reference with the same bf16-input / f32-accumulate precision as the kernel."""
    w1, b1, w2, b2, w3, b3 = params
    h = x.reshape(x.shape[0], IN_F).astype(jnp.bfloat16)
    h = jnp.dot(h, w1.astype(jnp.bfloat16), preferred_element_type=jnp.float32) + b1
    h = jnp.maximum(h, 0.0)
    h = jnp.dot(h.astype(jnp.bfloat16), w2.astype(jnp.bfloat16),
                preferred_element_type=jnp.float32) + b2
    h = jnp.maximum(h, 0.0)
    return jnp.dot(h.astype(jnp.bfloat16), w3.astype(jnp.bfloat16),
                   preferred_element_type=jnp.float32) + b3


if __name__ == "__main__":
    key = jax.random.PRNGKey(0)
    k_params, k_x, k_xl = jax.random.split(key, 3)

    params = init_params(k_params)
    prepped = prepare_params(params)

    # Small batch, same spatial shape as the torch example input (3, 28, 28).
    x = jax.random.uniform(k_x, (3, 28, 28), jnp.float32)
    logits = neural_network_forward(x, prepped)
    jax.block_until_ready(logits)
    assert logits.shape == (3, OUT_F), logits.shape

    ref_q = reference_forward_bf16(x, params)
    ref_f = reference_forward_f32(x, params)
    assert jnp.allclose(logits, ref_q, atol=1e-2, rtol=1e-2), "mismatch vs bf16 reference"
    assert jnp.allclose(logits, ref_f, atol=1e-1, rtol=1e-1), "mismatch vs f32 reference"

    # Larger batch exercising the multi-tile grid (2 load-balanced tiles of 160
    # rows) and the ragged last tile (300 is not a multiple of the tile size).
    x_large = jax.random.uniform(k_xl, (300, 28, 28), jnp.float32)
    logits_large = neural_network_forward(x_large, prepped)
    jax.block_until_ready(logits_large)
    assert logits_large.shape == (300, OUT_F), logits_large.shape
    assert jnp.allclose(logits_large, reference_forward_bf16(x_large, params),
                        atol=1e-2, rtol=1e-2), "mismatch vs bf16 reference (batched)"

    print("KERNEL_OK")
</pallas_src>

<mosaic_0001>
module attributes {stable_mosaic.version = 11 : i64} {
  func.func @mlp_kernel(%arg0: i32, %arg1: memref<16x784xf32, #tpu.memory_space<vmem>>, %arg2: memref<784x512xbf16, #tpu.memory_space<vmem>>, %arg3: memref<1x512xf32, #tpu.memory_space<vmem>>, %arg4: memref<512x512xbf16, #tpu.memory_space<vmem>>, %arg5: memref<1x512xf32, #tpu.memory_space<vmem>>, %arg6: memref<512x128xbf16, #tpu.memory_space<vmem>>, %arg7: memref<1x128xf32, #tpu.memory_space<vmem>>, %arg8: memref<16x128xbf16, #tpu.memory_space<vmem>>) attributes {dimension_semantics = [#tpu.dimension_semantics<parallel>], iteration_bounds = array<i64: 1>, scalar_prefetch = 0 : i64, scratch_operands = 0 : i64, tpu.core_type = #tpu.core_type<tc>, window_params = [{transform_indices = @transform_0, window_bounds = array<i64: 16, 784>}, {pipeline_mode = #tpu.pipeline_mode<synchronous>, transform_indices = @transform_1, window_bounds = array<i64: 784, 512>}, {pipeline_mode = #tpu.pipeline_mode<synchronous>, transform_indices = @transform_2, window_bounds = array<i64: 1, 512>}, {pipeline_mode = #tpu.pipeline_mode<synchronous>, transform_indices = @transform_3, window_bounds = array<i64: 512, 512>}, {pipeline_mode = #tpu.pipeline_mode<synchronous>, transform_indices = @transform_4, window_bounds = array<i64: 1, 512>}, {pipeline_mode = #tpu.pipeline_mode<synchronous>, transform_indices = @transform_5, window_bounds = array<i64: 512, 128>}, {pipeline_mode = #tpu.pipeline_mode<synchronous>, transform_indices = @transform_6, window_bounds = array<i64: 1, 128>}, {transform_indices = @transform_7, window_bounds = array<i64: 16, 128>}]} {
    %c0 = arith.constant 0 : index
    %c0_0 = arith.constant 0 : index
    %0 = vector.load %arg1[%c0, %c0_0] : memref<16x784xf32, #tpu.memory_space<vmem>>, vector<16x784xf32>
    %1 = arith.truncf %0 : vector<16x784xf32> to vector<16x784xbf16>
    %c0_1 = arith.constant 0 : index
    %c0_2 = arith.constant 0 : index
    %2 = vector.load %arg2[%c0_1, %c0_2] : memref<784x512xbf16, #tpu.memory_space<vmem>>, vector<784x512xbf16>
    %cst = arith.constant dense<0.000000e+00> : vector<16x512xf32>
    %3 = tpu.matmul %1, %2, %cst {dimension_numbers = #tpu.dot_dimension_numbers<[1], [0], [0], [1], [0, 0, 1, 1], [], []>} : vector<16x784xbf16>, vector<784x512xbf16>, vector<16x512xf32> -> vector<16x512xf32>
    %c0_3 = arith.constant 0 : index
    %c0_4 = arith.constant 0 : index
    %4 = vector.load %arg3[%c0_3, %c0_4] : memref<1x512xf32, #tpu.memory_space<vmem>>, vector<1x512xf32>
    %5 = vector.broadcast %4 : vector<1x512xf32> to vector<16x512xf32>
    %6 = arith.addf %3, %5 : vector<16x512xf32>
    %cst_5 = arith.constant 0.000000e+00 : f32
    %7 = vector.broadcast %cst_5 : f32 to vector<16x512xf32>
    %8 = arith.maximumf %6, %7 : vector<16x512xf32>
    %9 = arith.truncf %8 : vector<16x512xf32> to vector<16x512xbf16>
    %c0_6 = arith.constant 0 : index
    %c0_7 = arith.constant 0 : index
    %10 = vector.load %arg4[%c0_6, %c0_7] : memref<512x512xbf16, #tpu.memory_space<vmem>>, vector<512x512xbf16>
    %cst_8 = arith.constant dense<0.000000e+00> : vector<16x512xf32>
    %11 = tpu.matmul %9, %10, %cst_8 {dimension_numbers = #tpu.dot_dimension_numbers<[1], [0], [0], [1], [0, 0, 1, 1], [], []>} : vector<16x512xbf16>, vector<512x512xbf16>, vector<16x512xf32> -> vector<16x512xf32>
    %c0_9 = arith.constant 0 : index
    %c0_10 = arith.constant 0 : index
    %12 = vector.load %arg5[%c0_9, %c0_10] : memref<1x512xf32, #tpu.memory_space<vmem>>, vector<1x512xf32>
    %13 = vector.broadcast %12 : vector<1x512xf32> to vector<16x512xf32>
    %14 = arith.addf %11, %13 : vector<16x512xf32>
    %cst_11 = arith.constant 0.000000e+00 : f32
    %15 = vector.broadcast %cst_11 : f32 to vector<16x512xf32>
    %16 = arith.maximumf %14, %15 : vector<16x512xf32>
    %17 = arith.truncf %16 : vector<16x512xf32> to vector<16x512xbf16>
    %c0_12 = arith.constant 0 : index
    %c0_13 = arith.constant 0 : index
    %18 = vector.load %arg6[%c0_12, %c0_13] : memref<512x128xbf16, #tpu.memory_space<vmem>>, vector<512x128xbf16>
    %cst_14 = arith.constant dense<0.000000e+00> : vector<16x128xf32>
    %19 = tpu.matmul %17, %18, %cst_14 {dimension_numbers = #tpu.dot_dimension_numbers<[1], [0], [0], [1], [0, 0, 1, 1], [], []>} : vector<16x512xbf16>, vector<512x128xbf16>, vector<16x128xf32> -> vector<16x128xf32>
    %c0_15 = arith.constant 0 : index
    %c0_16 = arith.constant 0 : index
    %20 = vector.load %arg7[%c0_15, %c0_16] : memref<1x128xf32, #tpu.memory_space<vmem>>, vector<1x128xf32>
    %21 = vector.broadcast %20 : vector<1x128xf32> to vector<16x128xf32>
    %22 = arith.addf %19, %21 : vector<16x128xf32>
    %23 = arith.truncf %22 : vector<16x128xf32> to vector<16x128xbf16>
    %c0_17 = arith.constant 0 : index
    %c0_18 = arith.constant 0 : index
    %24 = vector.load %arg8[%c0_17, %c0_18] : memref<16x128xbf16, #tpu.memory_space<vmem>>, vector<16x128xbf16>
    tpu.vector_store %arg8[%c0_17, %c0_18], %23 {strides = array<i32>} : memref<16x128xbf16, #tpu.memory_space<vmem>>, vector<16x128xbf16>,
    return
  }
  func.func @transform_0(%arg0: i32) -> (i32, i32) {
    %c0_i32 = arith.constant 0 : i32
    %c0_i32_0 = arith.constant 0 : i32
    return %arg0, %c0_i32 : i32, i32
  }
  func.func @transform_1(%arg0: i32) -> (i32, i32) {
    %c0_i32 = arith.constant 0 : i32
    %c0_i32_0 = arith.constant 0 : i32
    %c0_i32_1 = arith.constant 0 : i32
    return %c0_i32, %c0_i32_0 : i32, i32
  }
  func.func @transform_2(%arg0: i32) -> (i32, i32) {
    %c0_i32 = arith.constant 0 : i32
    %c0_i32_0 = arith.constant 0 : i32
    %c0_i32_1 = arith.constant 0 : i32
    return %c0_i32, %c0_i32_0 : i32, i32
  }
  func.func @transform_3(%arg0: i32) -> (i32, i32) {
    %c0_i32 = arith.constant 0 : i32
    %c0_i32_0 = arith.constant 0 : i32
    %c0_i32_1 = arith.constant 0 : i32
    return %c0_i32, %c0_i32_0 : i32, i32
  }
  func.func @transform_4(%arg0: i32) -> (i32, i32) {
    %c0_i32 = arith.constant 0 : i32
    %c0_i32_0 = arith.constant 0 : i32
    %c0_i32_1 = arith.constant 0 : i32
    return %c0_i32, %c0_i32_0 : i32, i32
  }
  func.func @transform_5(%arg0: i32) -> (i32, i32) {
    %c0_i32 = arith.constant 0 : i32
    %c0_i32_0 = arith.constant 0 : i32
    %c0_i32_1 = arith.constant 0 : i32
    return %c0_i32, %c0_i32_0 : i32, i32
  }
  func.func @transform_6(%arg0: i32) -> (i32, i32) {
    %c0_i32 = arith.constant 0 : i32
    %c0_i32_0 = arith.constant 0 : i32
    %c0_i32_1 = arith.constant 0 : i32
    return %c0_i32, %c0_i32_0 : i32, i32
  }
  func.func @transform_7(%arg0: i32) -> (i32, i32) {
    %c0_i32 = arith.constant 0 : i32
    %c0_i32_0 = arith.constant 0 : i32
    return %arg0, %c0_i32 : i32, i32
  }
}

</mosaic_0001>

<llo_original>
// kernel: neural_network_forward.1
$region0: #{neural_network_forward.1}
  #allocation0 [shape = 'u32[]', space=smem, size = 0x4, offset = 0x4, fixed_abs, tag = 'smem constant byte address 0x4 - core index']
  #allocation1 [shape = 'u32[72,128]{1,0:T(1,128)}', space=vmem, size = 0x9000, scoped, tag = 'internal scratch']
  %s0 = inlined_call_operand.vmem [shape: f32[3,784], index: 0, kind: input, shape index: {}]
  %s1 = inlined_call_operand.hbm [shape: bf16[784,512], index: 1, kind: input, shape index: {}]
  %s2 = inlined_call_operand.vmem [shape: f32[1,512], index: 2, kind: input, shape index: {}]
  %s3 = inlined_call_operand.hbm [shape: bf16[512,512], index: 3, kind: input, shape index: {}]
  %s4 = inlined_call_operand.vmem [shape: f32[1,512], index: 4, kind: input, shape index: {}]
  %s5 = inlined_call_operand.hbm [shape: bf16[512,128], index: 5, kind: input, shape index: {}]
  %s6 = inlined_call_operand.vmem [shape: f32[1,128], index: 6, kind: input, shape index: {}]
  %s7 = inlined_call_operand.vmem [shape: bf16[3,128], index: 7, kind: output, shape index: {}]
  %s8 = sld [smem:[#allocation0]]
  $region80: #{neural_network_forward.1} parent=0
    _
  %s10 = ssub.s32 1, %s8
  %s11 = scalar_select 0, %s10, %s8
  $region1: #{neural_network_forward.1} parent=0
    #allocation2 [shape = 'u8[802816]{0}', space=vmem, size = 0xc4000, scoped, tag = 'input window, operand 1, single buffered']
    #allocation3 [shape = 's32[1]{0}', space=sflag, size = 0x4, scoped, tag = 'scoped memory for neural_network_forward.1']
    #allocation4 [shape = 'u8[524288]{0}', space=vmem, size = 0x80000, scoped, tag = 'input window, operand 3, single buffered']
    #allocation5 [shape = 's32[1]{0}', space=sflag, size = 0x4, scoped, tag = 'scoped memory for neural_network_forward.1']
    #allocation6 [shape = 'u8[131072]{0}', space=vmem, size = 0x20000, scoped, tag = 'input window, operand 5, single buffered']
    #allocation7 [shape = 'u8[4096]{0}', space=vmem, size = 0x1000, scoped, tag = 'output window, operand 0, single buffered']
    %12 = vsyncpa [#allocation3], 0
    %13 = vsyncpa [#allocation5], 0
    // Predicated region
    $region2: #{neural_network_forward.1} parent=1 // pred_check
      _
    $region3: #{neural_network_forward.1} parent=1 // pred_check_branch
      %15 = sbr.rel (0) target = $region5
    $region4: #{neural_network_forward.1} parent=1 // pred_region
      _
    $region5: #{neural_network_forward.1} parent=1 // pred_fallthru
      _
    // Predicated region
    $region6: #{neural_network_forward.1} parent=1 // pred_check
      _
    $region7: #{neural_network_forward.1} parent=1 // pred_check_branch
      %17 = sbr.rel (0) target = $region9
    $region8: #{neural_network_forward.1} parent=1 // pred_region
      %19 = vsyncadd [#allocation3], 0
      %s20 = sshll.u32 %s1, 4
      %s21 = int_to_ptr.hbm [resolvable:$true] %s20
      %s22 = sshll.u32 [#allocation2], 4
      %s23 = int_to_ptr.vmem [resolvable:$true] %s22
      %28 = dma.hbm_to_vmem [thread:$0]  %s21, 25088, %s23, [#allocation3], 256, 256, 16
    $region9: #{neural_network_forward.1} parent=1 // pred_fallthru
      _
    // Predicated region
    $region10: #{neural_network_forward.1} parent=1 // pred_check
      _
    $region11: #{neural_network_forward.1} parent=1 // pred_check_branch
      %30 = sbr.rel (0) target = $region13
    $region12: #{neural_network_forward.1} parent=1 // pred_region
      _
    $region13: #{neural_network_forward.1} parent=1 // pred_fallthru
      _
    // Predicated region
    $region14: #{neural_network_forward.1} parent=1 // pred_check
      _
    $region15: #{neural_network_forward.1} parent=1 // pred_check_branch
      %32 = sbr.rel (0) target = $region17
    $region16: #{neural_network_forward.1} parent=1 // pred_region
      %34 = vsyncadd [#allocation5], 0
      %s35 = sshll.u32 %s3, 4
      %s36 = int_to_ptr.hbm [resolvable:$true] %s35
      %s37 = sshll.u32 [#allocation4], 4
      %s38 = int_to_ptr.vmem [resolvable:$true] %s37
      %43 = dma.hbm_to_vmem [thread:$0]  %s36, 16384, %s38, [#allocation5], 256, 256, 16
    $region17: #{neural_network_forward.1} parent=1 // pred_fallthru
      _
    // Predicated region
    $region18: #{neural_network_forward.1} parent=1 // pred_check
      _
    $region19: #{neural_network_forward.1} parent=1 // pred_check_branch
      %45 = sbr.rel (0) target = $region21
    $region20: #{neural_network_forward.1} parent=1 // pred_region
      _
    $region21: #{neural_network_forward.1} parent=1 // pred_fallthru
      _
    // Predicated region
    $region22: #{neural_network_forward.1} parent=1 // pred_check
      _
    $region23: #{neural_network_forward.1} parent=1 // pred_check_branch
      %47 = sbr.rel (0) target = $region25
    $region24: #{neural_network_forward.1} parent=1 // pred_region
      %49 = vsyncadd [#allocation5], 0
      %s50 = sshll.u32 %s5, 4
      %s51 = int_to_ptr.hbm [resolvable:$true] %s50
      %s52 = sshll.u32 [#allocation6], 4
      %s53 = int_to_ptr.vmem [resolvable:$true] %s52
      %58 = dma.hbm_to_vmem [thread:$0]  %s51, 4096, %s53, [#allocation5], 64, 64, 4
    $region25: #{neural_network_forward.1} parent=1 // pred_fallthru
      _
    // Predicated region
    $region26: #{neural_network_forward.1} parent=1 // pred_check
      _
    $region27: #{neural_network_forward.1} parent=1 // pred_check_branch
      %60 = sbr.rel (0) target = $region29
    $region28: #{neural_network_forward.1} parent=1 // pred_region
      _
    $region29: #{neural_network_forward.1} parent=1 // pred_fallthru
      _
    // Predicated region
    $region30: #{neural_network_forward.1} parent=1 // pred_check
      _
    $region31: #{neural_network_forward.1} parent=1 // pred_check_branch
      %62 = sbr.rel (0) target = $region33
    $region32: #{neural_network_forward.1} parent=1 // pred_region
      %64 = dma.done [#allocation3], 25088
    $region33: #{neural_network_forward.1} parent=1 // pred_fallthru
      _
    // Predicated region
    $region34: #{neural_network_forward.1} parent=1 // pred_check
      _
    $region35: #{neural_network_forward.1} parent=1 // pred_check_branch
      %66 = sbr.rel (0) target = $region37
    $region36: #{neural_network_forward.1} parent=1 // pred_region
      %68 = dma.done [#allocation5], 16384
    $region37: #{neural_network_forward.1} parent=1 // pred_fallthru
      _
    // Predicated region
    $region38: #{neural_network_forward.1} parent=1 // pred_check
      _
    $region39: #{neural_network_forward.1} parent=1 // pred_check_branch
      %70 = sbr.rel (0) target = $region41
    $region40: #{neural_network_forward.1} parent=1 // pred_region
      %72 = dma.done [#allocation5], 4096
    $region41: #{neural_network_forward.1} parent=1 // pred_fallthru
      _
    %v74 = vld [vmem:[%s0] sm:$0xff]
    %v75 = vld [vmem:[%s0 + $0x8] sm:$0xff]
    %v76 = vld [vmem:[%s0 + $0x10] sm:$0xff]
    %v77 = vld [vmem:[%s0 + $0x18] sm:$0xf]
    %v78 = vld [vmem:[%s0 + $0x1c] sm:$0xff]
    %v79 = vld [vmem:[%s0 + $0x24] sm:$0xff]
    %v80 = vld [vmem:[%s0 + $0x2c] sm:$0xff]
    %v81 = vld [vmem:[%s0 + $0x34] sm:$0xf]
    %v82 = vld [vmem:[%s0 + $0x38] sm:$0xff]
    %v83 = vld [vmem:[%s0 + $0x40] sm:$0xff]
    %v84 = vld [vmem:[%s0 + $0x48] sm:$0xff]
    %v85 = vld [vmem:[%s0 + $0x50] sm:$0xf]
    %v86 = vld [vmem:[%s0 + $0x54] sm:$0xff]
    %v87 = vld [vmem:[%s0 + $0x5c] sm:$0xff]
    %v88 = vld [vmem:[%s0 + $0x64] sm:$0xff]
    %v89 = vld [vmem:[%s0 + $0x6c] sm:$0xf]
    %106 = vst [vmem:[#allocation1] ss:$2 sm:$0xff] %v74
    %s107 = scalar_lea.vmem [#allocation1], 1
    %108 = vst [vmem:[%s107] ss:$2 sm:$0xff] %v78
    %s109 = scalar_lea.vmem [#allocation1], 16
    %110 = vst [vmem:[%s109] ss:$2 sm:$0xff] %v75
    %s111 = scalar_lea.vmem [#allocation1], 17
    %112 = vst [vmem:[%s111] ss:$2 sm:$0xff] %v79
    %s113 = scalar_lea.vmem [#allocation1], 32
    %114 = vst [vmem:[%s113] ss:$2 sm:$0xff] %v76
    %s115 = scalar_lea.vmem [#allocation1], 33
    %116 = vst [vmem:[%s115] ss:$2 sm:$0xff] %v80
    %s117 = scalar_lea.vmem [#allocation1], 48
    %118 = vst [vmem:[%s117] ss:$2 sm:$0xff] %v77
    %s119 = scalar_lea.vmem [#allocation1], 49
    %120 = vst [vmem:[%s119] ss:$2 sm:$0xff] %v81
    %v121 = vld.sshfl [vmem:[#allocation1] sm:$0xff pattern:$0x75316420]
    %v122 = vld.sshfl [vmem:[#allocation1 + $0x8] sm:$0xff pattern:$0x75316420]
    %v123 = vld.sshfl [vmem:[#allocation1 + $0x10] sm:$0xff pattern:$0x75316420]
    %v124 = vld.sshfl [vmem:[#allocation1 + $0x18] sm:$0xff pattern:$0x75316420]
    %v125 = vld.sshfl [vmem:[#allocation1 + $0x20] sm:$0xff pattern:$0x75316420]
    %v126 = vld.sshfl [vmem:[#allocation1 + $0x28] sm:$0xff pattern:$0x75316420]
    %v127 = vld.sshfl [vmem:[#allocation1 + $0x30] sm:$0xff pattern:$0x75316420]
    %128 = vst [vmem:[#allocation1] ss:$2 sm:$0xff] %v82
    %129 = vst [vmem:[%s107] ss:$2 sm:$0xff] %v86
    %130 = vst [vmem:[%s109] ss:$2 sm:$0xff] %v83
    %131 = vst [vmem:[%s111] ss:$2 sm:$0xff] %v87
    %132 = vst [vmem:[%s113] ss:$2 sm:$0xff] %v84
    %133 = vst [vmem:[%s115] ss:$2 sm:$0xff] %v88
    %134 = vst [vmem:[%s117] ss:$2 sm:$0xff] %v85
    %135 = vst [vmem:[%s119] ss:$2 sm:$0xff] %v89
    %v136 = vld.sshfl [vmem:[#allocation1] sm:$0xff pattern:$0x75316420]
    %v137 = vld.sshfl [vmem:[#allocation1 + $0x8] sm:$0xff pattern:$0x75316420]
    %v138 = vld.sshfl [vmem:[#allocation1 + $0x10] sm:$0xff pattern:$0x75316420]
    %v139 = vld.sshfl [vmem:[#allocation1 + $0x18] sm:$0xff pattern:$0x75316420]
    %v140 = vld.sshfl [vmem:[#allocation1 + $0x20] sm:$0xff pattern:$0x75316420]
    %v141 = vld.sshfl [vmem:[#allocation1 + $0x28] sm:$0xff pattern:$0x75316420]
    %v142 = vld.sshfl [vmem:[#allocation1 + $0x30] sm:$0xff pattern:$0x75316420]
    %v157 = vpack.c.bf16 %v136, %v121
    %v158 = vpack.c.bf16 %v137, %v122
    %v159 = vpack.c.bf16 %v138, %v123
    %v160 = vpack.c.bf16 %v139, %v124
    %v161 = vpack.c.bf16 %v140, %v125
    %v162 = vpack.c.bf16 %v141, %v126
    %v163 = vpack.c.bf16 %v142, %v127
    %v164 = vld [vmem:[#allocation2] sm:$0xff]
    %v165 = vld [vmem:[#allocation2 + $0x8] sm:$0xff]
    %v166 = vld [vmem:[#allocation2 + $0x10] sm:$0xff]
    %v167 = vld [vmem:[#allocation2 + $0x18] sm:$0xff]
    %v168 = vld [vmem:[#allocation2 + $0x20] sm:$0xff]
    %v169 = vld [vmem:[#allocation2 + $0x28] sm:$0xff]
    %v170 = vld [vmem:[#allocation2 + $0x30] sm:$0xff]
    %v171 = vld [vmem:[#allocation2 + $0x38] sm:$0xff]
    %v172 = vld [vmem:[#allocation2 + $0x40] sm:$0xff]
    %v173 = vld [vmem:[#allocation2 + $0x48] sm:$0xff]
    %v174 = vld [vmem:[#allocation2 + $0x50] sm:$0xff]
    %v175 = vld [vmem:[#allocation2 + $0x58] sm:$0xff]
    %v176 = vld [vmem:[#allocation2 + $0x60] sm:$0xff]
    %v177 = vld [vmem:[#allocation2 + $0x68] sm:$0xff]
    %v178 = vld [vmem:[#allocation2 + $0x70] sm:$0xff]
    %v179 = vld [vmem:[#allocation2 + $0x78] sm:$0xff]
    %v180 = vld [vmem:[#allocation2 + $0x80] sm:$0xff]
    %v181 = vld [vmem:[#allocation2 + $0x88] sm:$0xff]
    %v182 = vld [vmem:[#allocation2 + $0x90] sm:$0xff]
    %v183 = vld [vmem:[#allocation2 + $0x98] sm:$0xff]
    %v184 = vld [vmem:[#allocation2 + $0xa0] sm:$0xff]
    %v185 = vld [vmem:[#allocation2 + $0xa8] sm:$0xff]
    %v186 = vld [vmem:[#allocation2 + $0xb0] sm:$0xff]
    %v187 = vld [vmem:[#allocation2 + $0xb8] sm:$0xff]
    %v188 = vld [vmem:[#allocation2 + $0xc0] sm:$0xff]
    %v189 = vld [vmem:[#allocation2 + $0xc8] sm:$0xff]
    %v190 = vld [vmem:[#allocation2 + $0xd0] sm:$0xff]
    %v191 = vld [vmem:[#allocation2 + $0xd8] sm:$0xff]
    %v192 = vld [vmem:[#allocation2 + $0xe0] sm:$0xff]
    %v193 = vld [vmem:[#allocation2 + $0xe8] sm:$0xff]
    %v194 = vld [vmem:[#allocation2 + $0xf0] sm:$0xff]
    %v195 = vld [vmem:[#allocation2 + $0xf8] sm:$0xff]
    %v196 = vld [vmem:[#allocation2 + $0x100] sm:$0xff]
    %v197 = vld [vmem:[#allocation2 + $0x108] sm:$0xff]
    %v198 = vld [vmem:[#allocation2 + $0x110] sm:$0xff]
    %v199 = vld [vmem:[#allocation2 + $0x118] sm:$0xff]
    %v200 = vld [vmem:[#allocation2 + $0x120] sm:$0xff]
    %v201 = vld [vmem:[#allocation2 + $0x128] sm:$0xff]
    %v202 = vld [vmem:[#allocation2 + $0x130] sm:$0xff]
    %v203 = vld [vmem:[#allocation2 + $0x138] sm:$0xff]
    %v204 = vld [vmem:[#allocation2 + $0x140] sm:$0xff]
    %v205 = vld [vmem:[#allocation2 + $0x148] sm:$0xff]
    %v206 = vld [vmem:[#allocation2 + $0x150] sm:$0xff]
    %v207 = vld [vmem:[#allocation2 + $0x158] sm:$0xff]
    %v208 = vld [vmem:[#allocation2 + $0x160] sm:$0xff]
    %v209 = vld [vmem:[#allocation2 + $0x168] sm:$0xff]
    %v210 = vld [vmem:[#allocation2 + $0x170] sm:$0xff]
    %v211 = vld [vmem:[#allocation2 + $0x178] sm:$0xff]
    %v212 = vld [vmem:[#allocation2 + $0x180] sm:$0xff]
    %v213 = vld [vmem:[#allocation2 + $0x188] sm:$0xff]
    %v214 = vld [vmem:[#allocation2 + $0x190] sm:$0xff]
    %v215 = vld [vmem:[#allocation2 + $0x198] sm:$0xff]
    %v216 = vld [vmem:[#allocation2 + $0x1a0] sm:$0xff]
    %v217 = vld [vmem:[#allocation2 + $0x1a8] sm:$0xff]
    %v218 = vld [vmem:[#allocation2 + $0x1b0] sm:$0xff]
    %v219 = vld [vmem:[#allocation2 + $0x1b8] sm:$0xff]
    %v220 = vld [vmem:[#allocation2 + $0x1c0] sm:$0xff]
    %v221 = vld [vmem:[#allocation2 + $0x1c8] sm:$0xff]
    %v222 = vld [vmem:[#allocation2 + $0x1d0] sm:$0xff]
    %v223 = vld [vmem:[#allocation2 + $0x1d8] sm:$0xff]
    %v224 = vld [vmem:[#allocation2 + $0x1e0] sm:$0xff]
    %v225 = vld [vmem:[#allocation2 + $0x1e8] sm:$0xff]
    %v226 = vld [vmem:[#allocation2 + $0x1f0] sm:$0xff]
    %v227 = vld [vmem:[#allocation2 + $0x1f8] sm:$0xff]
    %v228 = vld [vmem:[#allocation2 + $0x200] sm:$0xff]
    %v229 = vld [vmem:[#allocation2 + $0x208] sm:$0xff]
    %v230 = vld [vmem:[#allocation2 + $0x210] sm:$0xff]
    %v231 = vld [vmem:[#allocation2 + $0x218] sm:$0xff]
    %v232 = vld [vmem:[#allocation2 + $0x220] sm:$0xff]
    %v233 = vld [vmem:[#allocation2 + $0x228] sm:$0xff]
    %v234 = vld [vmem:[#allocation2 + $0x230] sm:$0xff]
    %v235 = vld [vmem:[#allocation2 + $0x238] sm:$0xff]
    %v236 = vld [vmem:[#allocation2 + $0x240] sm:$0xff]
    %v237 = vld [vmem:[#allocation2 + $0x248] sm:$0xff]
    %v238 = vld [vmem:[#allocation2 + $0x250] sm:$0xff]
    %v239 = vld [vmem:[#allocation2 + $0x258] sm:$0xff]
    %v240 = vld [vmem:[#allocation2 + $0x260] sm:$0xff]
    %v241 = vld [vmem:[#allocation2 + $0x268] sm:$0xff]
    %v242 = vld [vmem:[#allocation2 + $0x270] sm:$0xff]
    %v243 = vld [vmem:[#allocation2 + $0x278] sm:$0xff]
    %v244 = vld [vmem:[#allocation2 + $0x280] sm:$0xff]
    %v245 = vld [vmem:[#allocation2 + $0x288] sm:$0xff]
    %v246 = vld [vmem:[#allocation2 + $0x290] sm:$0xff]
    %v247 = vld [vmem:[#allocation2 + $0x298] sm:$0xff]
    %v248 = vld [vmem:[#allocation2 + $0x2a0] sm:$0xff]
    %v249 = vld [vmem:[#allocation2 + $0x2a8] sm:$0xff]
    %v250 = vld [vmem:[#allocation2 + $0x2b0] sm:$0xff]
    %v251 = vld [vmem:[#allocation2 + $0x2b8] sm:$0xff]
    %v252 = vld [vmem:[#allocation2 + $0x2c0] sm:$0xff]
    %v253 = vld [vmem:[#allocation2 + $0x2c8] sm:$0xff]
    %v254 = vld [vmem:[#allocation2 + $0x2d0] sm:$0xff]
    %v255 = vld [vmem:[#allocation2 + $0x2d8] sm:$0xff]
    %v256 = vld [vmem:[#allocation2 + $0x2e0] sm:$0xff]
    %v257 = vld [vmem:[#allocation2 + $0x2e8] sm:$0xff]
    %v258 = vld [vmem:[#allocation2 + $0x2f0] sm:$0xff]
    %v259 = vld [vmem:[#allocation2 + $0x2f8] sm:$0xff]
    %v260 = vld [vmem:[#allocation2 + $0x300] sm:$0xff]
    %v261 = vld [vmem:[#allocation2 + $0x308] sm:$0xff]
    %v262 = vld [vmem:[#allocation2 + $0x310] sm:$0xff]
    %v263 = vld [vmem:[#allocation2 + $0x318] sm:$0xff]
    %v264 = vld [vmem:[#allocation2 + $0x320] sm:$0xff]
    %v265 = vld [vmem:[#allocation2 + $0x328] sm:$0xff]
    %v266 = vld [vmem:[#allocation2 + $0x330] sm:$0xff]
    %v267 = vld [vmem:[#allocation2 + $0x338] sm:$0xff]
    %v268 = vld [vmem:[#allocation2 + $0x340] sm:$0xff]
    %v269 = vld [vmem:[#allocation2 + $0x348] sm:$0xff]
    %v270 = vld [vmem:[#allocation2 + $0x350] sm:$0xff]
    %v271 = vld [vmem:[#allocation2 + $0x358] sm:$0xff]
    %v272 = vld [vmem:[#allocation2 + $0x360] sm:$0xff]
    %v273 = vld [vmem:[#allocation2 + $0x368] sm:$0xff]
    %v274 = vld [vmem:[#allocation2 + $0x370] sm:$0xff]
    %v275 = vld [vmem:[#allocation2 + $0x378] sm:$0xff]
    %v276 = vld [vmem:[#allocation2 + $0x380] sm:$0xff]
    %v277 = vld [vmem:[#allocation2 + $0x388] sm:$0xff]
    %v278 = vld [vmem:[#allocation2 + $0x390] sm:$0xff]
    %v279 = vld [vmem:[#allocation2 + $0x398] sm:$0xff]
    %v280 = vld [vmem:[#allocation2 + $0x3a0] sm:$0xff]
    %v281 = vld [vmem:[#allocation2 + $0x3a8] sm:$0xff]
    %v282 = vld [vmem:[#allocation2 + $0x3b0] sm:$0xff]
    %v283 = vld [vmem:[#allocation2 + $0x3b8] sm:$0xff]
    %v284 = vld [vmem:[#allocation2 + $0x3c0] sm:$0xff]
    %v285 = vld [vmem:[#allocation2 + $0x3c8] sm:$0xff]
    %v286 = vld [vmem:[#allocation2 + $0x3d0] sm:$0xff]
    %v287 = vld [vmem:[#allocation2 + $0x3d8] sm:$0xff]
    %v288 = vld [vmem:[#allocation2 + $0x3e0] sm:$0xff]
    %v289 = vld [vmem:[#allocation2 + $0x3e8] sm:$0xff]
    %v290 = vld [vmem:[#allocation2 + $0x3f0] sm:$0xff]
    %v291 = vld [vmem:[#allocation2 + $0x3f8] sm:$0xff]
    %v292 = vld [vmem:[#allocation2 + $0x400] sm:$0xff]
    %v293 = vld [vmem:[#allocation2 + $0x408] sm:$0xff]
    %v294 = vld [vmem:[#allocation2 + $0x410] sm:$0xff]
    %v295 = vld [vmem:[#allocation2 + $0x418] sm:$0xff]
    %v296 = vld [vmem:[#allocation2 + $0x420] sm:$0xff]
    %v297 = vld [vmem:[#allocation2 + $0x428] sm:$0xff]
    %v298 = vld [vmem:[#allocation2 + $0x430] sm:$0xff]
    %v299 = vld [vmem:[#allocation2 + $0x438] sm:$0xff]
    %v300 = vld [vmem:[#allocation2 + $0x440] sm:$0xff]
    %v301 = vld [vmem:[#allocation2 + $0x448] sm:$0xff]
    %v302 = vld [vmem:[#allocation2 + $0x450] sm:$0xff]
    %v303 = vld [vmem:[#allocation2 + $0x458] sm:$0xff]
    %v304 = vld [vmem:[#allocation2 + $0x460] sm:$0xff]
    %v305 = vld [vmem:[#allocation2 + $0x468] sm:$0xff]
    %v306 = vld [vmem:[#allocation2 + $0x470] sm:$0xff]
    %v307 = vld [vmem:[#allocation2 + $0x478] sm:$0xff]
    %v308 = vld [vmem:[#allocation2 + $0x480] sm:$0xff]
    %v309 = vld [vmem:[#allocation2 + $0x488] sm:$0xff]
    %v310 = vld [vmem:[#allocation2 + $0x490] sm:$0xff]
    %v311 = vld [vmem:[#allocation2 + $0x498] sm:$0xff]
    %v312 = vld [vmem:[#allocation2 + $0x4a0] sm:$0xff]
    %v313 = vld [vmem:[#allocation2 + $0x4a8] sm:$0xff]
    %v314 = vld [vmem:[#allocation2 + $0x4b0] sm:$0xff]
    %v315 = vld [vmem:[#allocation2 + $0x4b8] sm:$0xff]
    %v316 = vld [vmem:[#allocation2 + $0x4c0] sm:$0xff]
    %v317 = vld [vmem:[#allocation2 + $0x4c8] sm:$0xff]
    %v318 = vld [vmem:[#allocation2 + $0x4d0] sm:$0xff]
    %v319 = vld [vmem:[#allocation2 + $0x4d8] sm:$0xff]
    %v320 = vld [vmem:[#allocation2 + $0x4e0] sm:$0xff]
    %v321 = vld [vmem:[#allocation2 + $0x4e8] sm:$0xff]
    %v322 = vld [vmem:[#allocation2 + $0x4f0] sm:$0xff]
    %v323 = vld [vmem:[#allocation2 + $0x4f8] sm:$0xff]
    %v324 = vld [vmem:[#allocation2 + $0x500] sm:$0xff]
    %v325 = vld [vmem:[#allocation2 + $0x508] sm:$0xff]
    %v326 = vld [vmem:[#allocation2 + $0x510] sm:$0xff]
    %v327 = vld [vmem:[#allocation2 + $0x518] sm:$0xff]
    %v328 = vld [vmem:[#allocation2 + $0x520] sm:$0xff]
    %v329 = vld [vmem:[#allocation2 + $0x528] sm:$0xff]
    %v330 = vld [vmem:[#allocation2 + $0x530] sm:$0xff]
    %v331 = vld [vmem:[#allocation2 + $0x538] sm:$0xff]
    %v332 = vld [vmem:[#allocation2 + $0x540] sm:$0xff]
    %v333 = vld [vmem:[#allocation2 + $0x548] sm:$0xff]
    %v334 = vld [vmem:[#allocation2 + $0x550] sm:$0xff]
    %v335 = vld [vmem:[#allocation2 + $0x558] sm:$0xff]
    %v336 = vld [vmem:[#allocation2 + $0x560] sm:$0xff]
    %v337 = vld [vmem:[#allocation2 + $0x568] sm:$0xff]
    %v338 = vld [vmem:[#allocation2 + $0x570] sm:$0xff]
    %v339 = vld [vmem:[#allocation2 + $0x578] sm:$0xff]
    %v340 = vld [vmem:[#allocation2 + $0x580] sm:$0xff]
    %v341 = vld [vmem:[#allocation2 + $0x588] sm:$0xff]
    %v342 = vld [vmem:[#allocation2 + $0x590] sm:$0xff]
    %v343 = vld [vmem:[#allocation2 + $0x598] sm:$0xff]
    %v344 = vld [vmem:[#allocation2 + $0x5a0] sm:$0xff]
    %v345 = vld [vmem:[#allocation2 + $0x5a8] sm:$0xff]
    %v346 = vld [vmem:[#allocation2 + $0x5b0] sm:$0xff]
    %v347 = vld [vmem:[#allocation2 + $0x5b8] sm:$0xff]
    %v348 = vld [vmem:[#allocation2 + $0x5c0] sm:$0xff]
    %v349 = vld [vmem:[#allocation2 + $0x5c8] sm:$0xff]
    %v350 = vld [vmem:[#allocation2 + $0x5d0] sm:$0xff]
    %v351 = vld [vmem:[#allocation2 + $0x5d8] sm:$0xff]
    %v352 = vld [vmem:[#allocation2 + $0x5e0] sm:$0xff]
    %v353 = vld [vmem:[#allocation2 + $0x5e8] sm:$0xff]
    %v354 = vld [vmem:[#allocation2 + $0x5f0] sm:$0xff]
    %v355 = vld [vmem:[#allocation2 + $0x5f8] sm:$0xff]
    %v356 = vld [vmem:[#allocation2 + $0x600] sm:$0xff]
    %v357 = vld [vmem:[#allocation2 + $0x608] sm:$0xff]
    %v358 = vld [vmem:[#allocation2 + $0x610] sm:$0xff]
    %v359 = vld [vmem:[#allocation2 + $0x618] sm:$0xff]
    %v360 = vld [vmem:[%s2] sm:$0xf]
    %v362 = vperm.slane %v360, 0
    %v363 = vperm.slane %v360, 1
    %v364 = vperm.slane %v360, 2
    %v365 = vperm.slane %v360, 3
    %v566 = vunpack.c.l.b16 %v164
    %v567 = vunpack.c.h.b16 %v164
    %v568 = vunpack.c.l.b16 %v165
    %v569 = vunpack.c.h.b16 %v165
    %v570 = vunpack.c.l.b16 %v166
    %v571 = vunpack.c.h.b16 %v166
    %v572 = vunpack.c.l.b16 %v167
    %v573 = vunpack.c.h.b16 %v167
    %v574 = vunpack.c.l.b16 %v168
    %v575 = vunpack.c.h.b16 %v168
    %v576 = vunpack.c.l.b16 %v169
    %v577 = vunpack.c.h.b16 %v169
    %v578 = vunpack.c.l.b16 %v170
    %v579 = vunpack.c.h.b16 %v170
    %v580 = vunpack.c.l.b16 %v171
    %v581 = vunpack.c.h.b16 %v171
    %v582 = vunpack.c.l.b16 %v172
    %v583 = vunpack.c.h.b16 %v172
    %v584 = vunpack.c.l.b16 %v173
    %v585 = vunpack.c.h.b16 %v173
    %v586 = vunpack.c.l.b16 %v174
    %v587 = vunpack.c.h.b16 %v174
    %v588 = vunpack.c.l.b16 %v175
    %v589 = vunpack.c.h.b16 %v175
    %v590 = vunpack.c.l.b16 %v176
    %v591 = vunpack.c.h.b16 %v176
    %v592 = vunpack.c.l.b16 %v177
    %v593 = vunpack.c.h.b16 %v177
    %v594 = vunpack.c.l.b16 %v178
    %v595 = vunpack.c.h.b16 %v178
    %v596 = vunpack.c.l.b16 %v179
    %v597 = vunpack.c.h.b16 %v179
    %v598 = vunpack.c.l.b16 %v180
    %v599 = vunpack.c.h.b16 %v180
    %v600 = vunpack.c.l.b16 %v181
    %v601 = vunpack.c.h.b16 %v181
    %v602 = vunpack.c.l.b16 %v182
    %v603 = vunpack.c.h.b16 %v182
    %v604 = vunpack.c.l.b16 %v183
    %v605 = vunpack.c.h.b16 %v183
    %v606 = vunpack.c.l.b16 %v184
    %v607 = vunpack.c.h.b16 %v184
    %v608 = vunpack.c.l.b16 %v185
    %v609 = vunpack.c.h.b16 %v185
    %v610 = vunpack.c.l.b16 %v186
    %v611 = vunpack.c.h.b16 %v186
    %v612 = vunpack.c.l.b16 %v187
    %v613 = vunpack.c.h.b16 %v187
    %v614 = vunpack.c.l.b16 %v188
    %v615 = vunpack.c.h.b16 %v188
    %v616 = vunpack.c.l.b16 %v189
    %v617 = vunpack.c.h.b16 %v189
    %v618 = vunpack.c.l.b16 %v190
    %v619 = vunpack.c.h.b16 %v190
    %v620 = vunpack.c.l.b16 %v191
    %v621 = vunpack.c.h.b16 %v191
    %v622 = vunpack.c.l.b16 %v192
    %v623 = vunpack.c.h.b16 %v192
    %v624 = vunpack.c.l.b16 %v193
    %v625 = vunpack.c.h.b16 %v193
    %v626 = vunpack.c.l.b16 %v194
    %v627 = vunpack.c.h.b16 %v194
    %v628 = vunpack.c.l.b16 %v195
    %v629 = vunpack.c.h.b16 %v195
    %v630 = vunpack.c.l.b16 %v196
    %v631 = vunpack.c.h.b16 %v196
    %v632 = vunpack.c.l.b16 %v197
    %v633 = vunpack.c.h.b16 %v197
    %v634 = vunpack.c.l.b16 %v198
    %v635 = vunpack.c.h.b16 %v198
    %v636 = vunpack.c.l.b16 %v199
    %v637 = vunpack.c.h.b16 %v199
    %v638 = vunpack.c.l.b16 %v200
    %v639 = vunpack.c.h.b16 %v200
    %v640 = vunpack.c.l.b16 %v201
    %v641 = vunpack.c.h.b16 %v201
    %v642 = vunpack.c.l.b16 %v202
    %v643 = vunpack.c.h.b16 %v202
    %v644 = vunpack.c.l.b16 %v203
    %v645 = vunpack.c.h.b16 %v203
    %v646 = vunpack.c.l.b16 %v204
    %v647 = vunpack.c.h.b16 %v204
    %v648 = vunpack.c.l.b16 %v205
    %v649 = vunpack.c.h.b16 %v205
    %v650 = vunpack.c.l.b16 %v206
    %v651 = vunpack.c.h.b16 %v206
    %v652 = vunpack.c.l.b16 %v207
    %v653 = vunpack.c.h.b16 %v207
    %v654 = vunpack.c.l.b16 %v208
    %v655 = vunpack.c.h.b16 %v208
    %v656 = vunpack.c.l.b16 %v209
    %v657 = vunpack.c.h.b16 %v209
    %v658 = vunpack.c.l.b16 %v210
    %v659 = vunpack.c.h.b16 %v210
    %v660 = vunpack.c.l.b16 %v211
    %v661 = vunpack.c.h.b16 %v211
    %v662 = vunpack.c.l.b16 %v212
    %v663 = vunpack.c.h.b16 %v212
    %v664 = vunpack.c.l.b16 %v213
    %v665 = vunpack.c.h.b16 %v213
    %v666 = vunpack.c.l.b16 %v214
    %v667 = vunpack.c.h.b16 %v214
    %v668 = vunpack.c.l.b16 %v215
    %v669 = vunpack.c.h.b16 %v215
    %v670 = vunpack.c.l.b16 %v216
    %v671 = vunpack.c.h.b16 %v216
    %v672 = vunpack.c.l.b16 %v217
    %v673 = vunpack.c.h.b16 %v217
    %v674 = vunpack.c.l.b16 %v218
    %v675 = vunpack.c.h.b16 %v218
    %v676 = vunpack.c.l.b16 %v219
    %v677 = vunpack.c.h.b16 %v219
    %v678 = vunpack.c.l.b16 %v220
    %v679 = vunpack.c.h.b16 %v220
    %v680 = vunpack.c.l.b16 %v221
    %v681 = vunpack.c.h.b16 %v221
    %v682 = vunpack.c.l.b16 %v222
    %v683 = vunpack.c.h.b16 %v222
    %v684 = vunpack.c.l.b16 %v223
    %v685 = vunpack.c.h.b16 %v223
    %v686 = vunpack.c.l.b16 %v224
    %v687 = vunpack.c.h.b16 %v224
    %v688 = vunpack.c.l.b16 %v225
    %v689 = vunpack.c.h.b16 %v225
    %v690 = vunpack.c.l.b16 %v226
    %v691 = vunpack.c.h.b16 %v226
    %v692 = vunpack.c.l.b16 %v227
    %v693 = vunpack.c.h.b16 %v227
    %v694 = vunpack.c.l.b16 %v228
    %v695 = vunpack.c.h.b16 %v228
    %v696 = vunpack.c.l.b16 %v229
    %v697 = vunpack.c.h.b16 %v229
    %v698 = vunpack.c.l.b16 %v230
    %v699 = vunpack.c.h.b16 %v230
    %v700 = vunpack.c.l.b16 %v231
    %v701 = vunpack.c.h.b16 %v231
    %v702 = vunpack.c.l.b16 %v232
    %v703 = vunpack.c.h.b16 %v232
    %v704 = vunpack.c.l.b16 %v233
    %v705 = vunpack.c.h.b16 %v233
    %v706 = vunpack.c.l.b16 %v234
    %v707 = vunpack.c.h.b16 %v234
    %v708 = vunpack.c.l.b16 %v235
    %v709 = vunpack.c.h.b16 %v235
    %v710 = vunpack.c.l.b16 %v236
    %v711 = vunpack.c.h.b16 %v236
    %v712 = vunpack.c.l.b16 %v237
    %v713 = vunpack.c.h.b16 %v237
    %v714 = vunpack.c.l.b16 %v238
    %v715 = vunpack.c.h.b16 %v238
    %v716 = vunpack.c.l.b16 %v239
    %v717 = vunpack.c.h.b16 %v239
    %v718 = vunpack.c.l.b16 %v240
    %v719 = vunpack.c.h.b16 %v240
    %v720 = vunpack.c.l.b16 %v241
    %v721 = vunpack.c.h.b16 %v241
    %v722 = vunpack.c.l.b16 %v242
    %v723 = vunpack.c.h.b16 %v242
    %v724 = vunpack.c.l.b16 %v243
    %v725 = vunpack.c.h.b16 %v243
    %v726 = vunpack.c.l.b16 %v244
    %v727 = vunpack.c.h.b16 %v244
    %v728 = vunpack.c.l.b16 %v245
    %v729 = vunpack.c.h.b16 %v245
    %v730 = vunpack.c.l.b16 %v246
    %v731 = vunpack.c.h.b16 %v246
    %v732 = vunpack.c.l.b16 %v247
    %v733 = vunpack.c.h.b16 %v247
    %v734 = vunpack.c.l.b16 %v248
    %v735 = vunpack.c.h.b16 %v248
    %v736 = vunpack.c.l.b16 %v249
    %v737 = vunpack.c.h.b16 %v249
    %v738 = vunpack.c.l.b16 %v250
    %v739 = vunpack.c.h.b16 %v250
    %v740 = vunpack.c.l.b16 %v251
    %v741 = vunpack.c.h.b16 %v251
    %v742 = vunpack.c.l.b16 %v252
    %v743 = vunpack.c.h.b16 %v252
    %v744 = vunpack.c.l.b16 %v253
    %v745 = vunpack.c.h.b16 %v253
    %v746 = vunpack.c.l.b16 %v254
    %v747 = vunpack.c.h.b16 %v254
    %v748 = vunpack.c.l.b16 %v255
    %v749 = vunpack.c.h.b16 %v255
    %v750 = vunpack.c.l.b16 %v256
    %v751 = vunpack.c.h.b16 %v256
    %v752 = vunpack.c.l.b16 %v257
    %v753 = vunpack.c.h.b16 %v257
    %v754 = vunpack.c.l.b16 %v258
    %v755 = vunpack.c.h.b16 %v258
    %v756 = vunpack.c.l.b16 %v259
    %v757 = vunpack.c.h.b16 %v259
    %v758 = vunpack.c.l.b16 %v260
    %v759 = vunpack.c.h.b16 %v260
    %v760 = vunpack.c.l.b16 %v261
    %v761 = vunpack.c.h.b16 %v261
    %v762 = vunpack.c.l.b16 %v262
    %v763 = vunpack.c.h.b16 %v262
    %v764 = vunpack.c.l.b16 %v263
    %v765 = vunpack.c.h.b16 %v263
    %v766 = vunpack.c.l.b16 %v264
    %v767 = vunpack.c.h.b16 %v264
    %v768 = vunpack.c.l.b16 %v265
    %v769 = vunpack.c.h.b16 %v265
    %v770 = vunpack.c.l.b16 %v266
    %v771 = vunpack.c.h.b16 %v266
    %v772 = vunpack.c.l.b16 %v267
    %v773 = vunpack.c.h.b16 %v267
    %v774 = vunpack.c.l.b16 %v268
    %v775 = vunpack.c.h.b16 %v268
    %v776 = vunpack.c.l.b16 %v269
    %v777 = vunpack.c.h.b16 %v269
    %v778 = vunpack.c.l.b16 %v270
    %v779 = vunpack.c.h.b16 %v270
    %v780 = vunpack.c.l.b16 %v271
    %v781 = vunpack.c.h.b16 %v271
    %v782 = vunpack.c.l.b16 %v272
    %v783 = vunpack.c.h.b16 %v272
    %v784 = vunpack.c.l.b16 %v273
    %v785 = vunpack.c.h.b16 %v273
    %v786 = vunpack.c.l.b16 %v274
    %v787 = vunpack.c.h.b16 %v274
    %v788 = vunpack.c.l.b16 %v275
    %v789 = vunpack.c.h.b16 %v275
    %v790 = vunpack.c.l.b16 %v276
    %v791 = vunpack.c.h.b16 %v276
    %v792 = vunpack.c.l.b16 %v277
    %v793 = vunpack.c.h.b16 %v277
    %v794 = vunpack.c.l.b16 %v278
    %v795 = vunpack.c.h.b16 %v278
    %v796 = vunpack.c.l.b16 %v279
    %v797 = vunpack.c.h.b16 %v279
    %v798 = vunpack.c.l.b16 %v280
    %v799 = vunpack.c.h.b16 %v280
    %v800 = vunpack.c.l.b16 %v281
    %v801 = vunpack.c.h.b16 %v281
    %v802 = vunpack.c.l.b16 %v282
    %v803 = vunpack.c.h.b16 %v282
    %v804 = vunpack.c.l.b16 %v283
    %v805 = vunpack.c.h.b16 %v283
    %v806 = vunpack.c.l.b16 %v284
    %v807 = vunpack.c.h.b16 %v284
    %v808 = vunpack.c.l.b16 %v285
    %v809 = vunpack.c.h.b16 %v285
    %v810 = vunpack.c.l.b16 %v286
    %v811 = vunpack.c.h.b16 %v286
    %v812 = vunpack.c.l.b16 %v287
    %v813 = vunpack.c.h.b16 %v287
    %v814 = vunpack.c.l.b16 %v288
    %v815 = vunpack.c.h.b16 %v288
    %v816 = vunpack.c.l.b16 %v289
    %v817 = vunpack.c.h.b16 %v289
    %v818 = vunpack.c.l.b16 %v290
    %v819 = vunpack.c.h.b16 %v290
    %v820 = vunpack.c.l.b16 %v291
    %v821 = vunpack.c.h.b16 %v291
    %v822 = vunpack.c.l.b16 %v292
    %v823 = vunpack.c.h.b16 %v292
    %v824 = vunpack.c.l.b16 %v293
    %v825 = vunpack.c.h.b16 %v293
    %v826 = vunpack.c.l.b16 %v294
    %v827 = vunpack.c.h.b16 %v294
    %v828 = vunpack.c.l.b16 %v295
    %v829 = vunpack.c.h.b16 %v295
    %v830 = vunpack.c.l.b16 %v296
    %v831 = vunpack.c.h.b16 %v296
    %v832 = vunpack.c.l.b16 %v297
    %v833 = vunpack.c.h.b16 %v297
    %v834 = vunpack.c.l.b16 %v298
    %v835 = vunpack.c.h.b16 %v298
    %v836 = vunpack.c.l.b16 %v299
    %v837 = vunpack.c.h.b16 %v299
    %v838 = vunpack.c.l.b16 %v300
    %v839 = vunpack.c.h.b16 %v300
    %v840 = vunpack.c.l.b16 %v301
    %v841 = vunpack.c.h.b16 %v301
    %v842 = vunpack.c.l.b16 %v302
    %v843 = vunpack.c.h.b16 %v302
    %v844 = vunpack.c.l.b16 %v303
    %v845 = vunpack.c.h.b16 %v303
    %v846 = vunpack.c.l.b16 %v304
    %v847 = vunpack.c.h.b16 %v304
    %v848 = vunpack.c.l.b16 %v305
    %v849 = vunpack.c.h.b16 %v305
    %v850 = vunpack.c.l.b16 %v306
    %v851 = vunpack.c.h.b16 %v306
    %v852 = vunpack.c.l.b16 %v307
    %v853 = vunpack.c.h.b16 %v307
    %v854 = vunpack.c.l.b16 %v308
    %v855 = vunpack.c.h.b16 %v308
    %v856 = vunpack.c.l.b16 %v309
    %v857 = vunpack.c.h.b16 %v309
    %v858 = vunpack.c.l.b16 %v310
    %v859 = vunpack.c.h.b16 %v310
    %v860 = vunpack.c.l.b16 %v311
    %v861 = vunpack.c.h.b16 %v311
    %v862 = vunpack.c.l.b16 %v312
    %v863 = vunpack.c.h.b16 %v312
    %v864 = vunpack.c.l.b16 %v313
    %v865 = vunpack.c.h.b16 %v313
    %v866 = vunpack.c.l.b16 %v314
    %v867 = vunpack.c.h.b16 %v314
    %v868 = vunpack.c.l.b16 %v315
    %v869 = vunpack.c.h.b16 %v315
    %v870 = vunpack.c.l.b16 %v316
    %v871 = vunpack.c.h.b16 %v316
    %v872 = vunpack.c.l.b16 %v317
    %v873 = vunpack.c.h.b16 %v317
    %v874 = vunpack.c.l.b16 %v318
    %v875 = vunpack.c.h.b16 %v318
    %v876 = vunpack.c.l.b16 %v319
    %v877 = vunpack.c.h.b16 %v319
    %v878 = vunpack.c.l.b16 %v320
    %v879 = vunpack.c.h.b16 %v320
    %v880 = vunpack.c.l.b16 %v321
    %v881 = vunpack.c.h.b16 %v321
    %v882 = vunpack.c.l.b16 %v322
    %v883 = vunpack.c.h.b16 %v322
    %v884 = vunpack.c.l.b16 %v323
    %v885 = vunpack.c.h.b16 %v323
    %v886 = vunpack.c.l.b16 %v324
    %v887 = vunpack.c.h.b16 %v324
    %v888 = vunpack.c.l.b16 %v325
    %v889 = vunpack.c.h.b16 %v325
    %v890 = vunpack.c.l.b16 %v326
    %v891 = vunpack.c.h.b16 %v326
    %v892 = vunpack.c.l.b16 %v327
    %v893 = vunpack.c.h.b16 %v327
    %v894 = vunpack.c.l.b16 %v328
    %v895 = vunpack.c.h.b16 %v328
    %v896 = vunpack.c.l.b16 %v329
    %v897 = vunpack.c.h.b16 %v329
    %v898 = vunpack.c.l.b16 %v330
    %v899 = vunpack.c.h.b16 %v330
    %v900 = vunpack.c.l.b16 %v331
    %v901 = vunpack.c.h.b16 %v331
    %v902 = vunpack.c.l.b16 %v332
    %v903 = vunpack.c.h.b16 %v332
    %v904 = vunpack.c.l.b16 %v333
    %v905 = vunpack.c.h.b16 %v333
    %v906 = vunpack.c.l.b16 %v334
    %v907 = vunpack.c.h.b16 %v334
    %v908 = vunpack.c.l.b16 %v335
    %v909 = vunpack.c.h.b16 %v335
    %v910 = vunpack.c.l.b16 %v336
    %v911 = vunpack.c.h.b16 %v336
    %v912 = vunpack.c.l.b16 %v337
    %v913 = vunpack.c.h.b16 %v337
    %v914 = vunpack.c.l.b16 %v338
    %v915 = vunpack.c.h.b16 %v338
    %v916 = vunpack.c.l.b16 %v339
    %v917 = vunpack.c.h.b16 %v339
    %v918 = vunpack.c.l.b16 %v340
    %v919 = vunpack.c.h.b16 %v340
    %v920 = vunpack.c.l.b16 %v341
    %v921 = vunpack.c.h.b16 %v341
    %v922 = vunpack.c.l.b16 %v342
    %v923 = vunpack.c.h.b16 %v342
    %v924 = vunpack.c.l.b16 %v343
    %v925 = vunpack.c.h.b16 %v343
    %v926 = vunpack.c.l.b16 %v344
    %v927 = vunpack.c.h.b16 %v344
    %v928 = vunpack.c.l.b16 %v345
    %v929 = vunpack.c.h.b16 %v345
    %v930 = vunpack.c.l.b16 %v346
    %v931 = vunpack.c.h.b16 %v346
    %v932 = vunpack.c.l.b16 %v347
    %v933 = vunpack.c.h.b16 %v347
    %v934 = vunpack.c.l.b16 %v348
    %v935 = vunpack.c.h.b16 %v348
    %v936 = vunpack.c.l.b16 %v349
    %v937 = vunpack.c.h.b16 %v349
    %v938 = vunpack.c.l.b16 %v350
    %v939 = vunpack.c.h.b16 %v350
    %v940 = vunpack.c.l.b16 %v351
    %v941 = vunpack.c.h.b16 %v351
    %v942 = vunpack.c.l.b16 %v352
    %v943 = vunpack.c.h.b16 %v352
    %v944 = vunpack.c.l.b16 %v353
    %v945 = vunpack.c.h.b16 %v353
    %v946 = vunpack.c.l.b16 %v354
    %v947 = vunpack.c.h.b16 %v354
    %v948 = vunpack.c.l.b16 %v355
    %v949 = vunpack.c.h.b16 %v355
    %v950 = vunpack.c.l.b16 %v356
    %v951 = vunpack.c.h.b16 %v356
    %v952 = vunpack.c.l.b16 %v357
    %v953 = vunpack.c.h.b16 %v357
    %v954 = vunpack.c.l.b16 %v358
    %v955 = vunpack.c.h.b16 %v358
    %v956 = vunpack.c.l.b16 %v359
    %v957 = vunpack.c.h.b16 %v359
    %v958 = vpack.c.b16 %v570, %v566
    %v959 = vpack.c.b16 %v571, %v567
    %v960 = vpack.c.b16 %v572, %v568
    %v961 = vpack.c.b16 %v573, %v569
    %v962 = vpack.c.b16 %v578, %v574
    %v963 = vpack.c.b16 %v579, %v575
    %v964 = vpack.c.b16 %v580, %v576
    %v965 = vpack.c.b16 %v581, %v577
    %v966 = vpack.c.b16 %v586, %v582
    %v967 = vpack.c.b16 %v587, %v583
    %v968 = vpack.c.b16 %v588, %v584
    %v969 = vpack.c.b16 %v589, %v585
    %v970 = vpack.c.b16 %v594, %v590
    %v971 = vpack.c.b16 %v595, %v591
    %v972 = vpack.c.b16 %v596, %v592
    %v973 = vpack.c.b16 %v597, %v593
    %v974 = vpack.c.b16 %v602, %v598
    %v975 = vpack.c.b16 %v603, %v599
    %v976 = vpack.c.b16 %v604, %v600
    %v977 = vpack.c.b16 %v605, %v601
    %v978 = vpack.c.b16 %v610, %v606
    %v979 = vpack.c.b16 %v611, %v607
    %v980 = vpack.c.b16 %v612, %v608
    %v981 = vpack.c.b16 %v613, %v609
    %v982 = vpack.c.b16 %v618, %v614
    %v983 = vpack.c.b16 %v619, %v615
    %v984 = vpack.c.b16 %v620, %v616
    %v985 = vpack.c.b16 %v621, %v617
    %v986 = vpack.c.b16 %v626, %v622
    %v987 = vpack.c.b16 %v627, %v623
    %v988 = vpack.c.b16 %v628, %v624
    %v989 = vpack.c.b16 %v629, %v625
    %v990 = vpack.c.b16 %v634, %v630
    %v991 = vpack.c.b16 %v635, %v631
    %v992 = vpack.c.b16 %v636, %v632
    %v993 = vpack.c.b16 %v637, %v633
    %v994 = vpack.c.b16 %v642, %v638
    %v995 = vpack.c.b16 %v643, %v639
    %v996 = vpack.c.b16 %v644, %v640
    %v997 = vpack.c.b16 %v645, %v641
    %v998 = vpack.c.b16 %v650, %v646
    %v999 = vpack.c.b16 %v651, %v647
    %v1000 = vpack.c.b16 %v652, %v648
    %v1001 = vpack.c.b16 %v653, %v649
    %v1002 = vpack.c.b16 %v658, %v654
    %v1003 = vpack.c.b16 %v659, %v655
    %v1004 = vpack.c.b16 %v660, %v656
    %v1005 = vpack.c.b16 %v661, %v657
    %v1006 = vpack.c.b16 %v666, %v662
    %v1007 = vpack.c.b16 %v667, %v663
    %v1008 = vpack.c.b16 %v668, %v664
    %v1009 = vpack.c.b16 %v669, %v665
    %v1010 = vpack.c.b16 %v674, %v670
    %v1011 = vpack.c.b16 %v675, %v671
    %v1012 = vpack.c.b16 %v676, %v672
    %v1013 = vpack.c.b16 %v677, %v673
    %v1014 = vpack.c.b16 %v682, %v678
    %v1015 = vpack.c.b16 %v683, %v679
    %v1016 = vpack.c.b16 %v684, %v680
    %v1017 = vpack.c.b16 %v685, %v681
    %v1018 = vpack.c.b16 %v690, %v686
    %v1019 = vpack.c.b16 %v691, %v687
    %v1020 = vpack.c.b16 %v692, %v688
    %v1021 = vpack.c.b16 %v693, %v689
    %v1022 = vpack.c.b16 %v698, %v694
    %v1023 = vpack.c.b16 %v699, %v695
    %v1024 = vpack.c.b16 %v700, %v696
    %v1025 = vpack.c.b16 %v701, %v697
    %v1026 = vpack.c.b16 %v706, %v702
    %v1027 = vpack.c.b16 %v707, %v703
    %v1028 = vpack.c.b16 %v708, %v704
    %v1029 = vpack.c.b16 %v709, %v705
    %v1030 = vpack.c.b16 %v714, %v710
    %v1031 = vpack.c.b16 %v715, %v711
    %v1032 = vpack.c.b16 %v716, %v712
    %v1033 = vpack.c.b16 %v717, %v713
    %v1034 = vpack.c.b16 %v722, %v718
    %v1035 = vpack.c.b16 %v723, %v719
    %v1036 = vpack.c.b16 %v724, %v720
    %v1037 = vpack.c.b16 %v725, %v721
    %v1038 = vpack.c.b16 %v730, %v726
    %v1039 = vpack.c.b16 %v731, %v727
    %v1040 = vpack.c.b16 %v732, %v728
    %v1041 = vpack.c.b16 %v733, %v729
    %v1042 = vpack.c.b16 %v738, %v734
    %v1043 = vpack.c.b16 %v739, %v735
    %v1044 = vpack.c.b16 %v740, %v736
    %v1045 = vpack.c.b16 %v741, %v737
    %v1046 = vpack.c.b16 %v746, %v742
    %v1047 = vpack.c.b16 %v747, %v743
    %v1048 = vpack.c.b16 %v748, %v744
    %v1049 = vpack.c.b16 %v749, %v745
    %v1050 = vpack.c.b16 %v754, %v750
    %v1051 = vpack.c.b16 %v755, %v751
    %v1052 = vpack.c.b16 %v756, %v752
    %v1053 = vpack.c.b16 %v757, %v753
    %v1054 = vpack.c.b16 %v762, %v758
    %v1055 = vpack.c.b16 %v763, %v759
    %v1056 = vpack.c.b16 %v764, %v760
    %v1057 = vpack.c.b16 %v765, %v761
    %v1058 = vpack.c.b16 %v770, %v766
    %v1059 = vpack.c.b16 %v771, %v767
    %v1060 = vpack.c.b16 %v772, %v768
    %v1061 = vpack.c.b16 %v773, %v769
    %v1062 = vpack.c.b16 %v778, %v774
    %v1063 = vpack.c.b16 %v779, %v775
    %v1064 = vpack.c.b16 %v780, %v776
    %v1065 = vpack.c.b16 %v781, %v777
    %v1066 = vpack.c.b16 %v786, %v782
    %v1067 = vpack.c.b16 %v787, %v783
    %v1068 = vpack.c.b16 %v788, %v784
    %v1069 = vpack.c.b16 %v789, %v785
    %v1070 = vpack.c.b16 %v794, %v790
    %v1071 = vpack.c.b16 %v795, %v791
    %v1072 = vpack.c.b16 %v796, %v792
    %v1073 = vpack.c.b16 %v797, %v793
    %v1074 = vpack.c.b16 %v802, %v798
    %v1075 = vpack.c.b16 %v803, %v799
    %v1076 = vpack.c.b16 %v804, %v800
    %v1077 = vpack.c.b16 %v805, %v801
    %v1078 = vpack.c.b16 %v810, %v806
    %v1079 = vpack.c.b16 %v811, %v807
    %v1080 = vpack.c.b16 %v812, %v808
    %v1081 = vpack.c.b16 %v813, %v809
    %v1082 = vpack.c.b16 %v818, %v814
    %v1083 = vpack.c.b16 %v819, %v815
    %v1084 = vpack.c.b16 %v820, %v816
    %v1085 = vpack.c.b16 %v821, %v817
    %v1086 = vpack.c.b16 %v826, %v822
    %v1087 = vpack.c.b16 %v827, %v823
    %v1088 = vpack.c.b16 %v828, %v824
    %v1089 = vpack.c.b16 %v829, %v825
    %v1090 = vpack.c.b16 %v834, %v830
    %v1091 = vpack.c.b16 %v835, %v831
    %v1092 = vpack.c.b16 %v836, %v832
    %v1093 = vpack.c.b16 %v837, %v833
    %v1094 = vpack.c.b16 %v842, %v838
    %v1095 = vpack.c.b16 %v843, %v839
    %v1096 = vpack.c.b16 %v844, %v840
    %v1097 = vpack.c.b16 %v845, %v841
    %v1098 = vpack.c.b16 %v850, %v846
    %v1099 = vpack.c.b16 %v851, %v847
    %v1100 = vpack.c.b16 %v852, %v848
    %v1101 = vpack.c.b16 %v853, %v849
    %v1102 = vpack.c.b16 %v858, %v854
    %v1103 = vpack.c.b16 %v859, %v855
    %v1104 = vpack.c.b16 %v860, %v856
    %v1105 = vpack.c.b16 %v861, %v857
    %v1106 = vpack.c.b16 %v866, %v862
    %v1107 = vpack.c.b16 %v867, %v863
    %v1108 = vpack.c.b16 %v868, %v864
    %v1109 = vpack.c.b16 %v869, %v865
    %v1110 = vpack.c.b16 %v874, %v870
    %v1111 = vpack.c.b16 %v875, %v871
    %v1112 = vpack.c.b16 %v876, %v872
    %v1113 = vpack.c.b16 %v877, %v873
    %v1114 = vpack.c.b16 %v882, %v878
    %v1115 = vpack.c.b16 %v883, %v879
    %v1116 = vpack.c.b16 %v884, %v880
    %v1117 = vpack.c.b16 %v885, %v881
    %v1118 = vpack.c.b16 %v890, %v886
    %v1119 = vpack.c.b16 %v891, %v887
    %v1120 = vpack.c.b16 %v892, %v888
    %v1121 = vpack.c.b16 %v893, %v889
    %v1122 = vpack.c.b16 %v898, %v894
    %v1123 = vpack.c.b16 %v899, %v895
    %v1124 = vpack.c.b16 %v900, %v896
    %v1125 = vpack.c.b16 %v901, %v897
    %v1126 = vpack.c.b16 %v906, %v902
    %v1127 = vpack.c.b16 %v907, %v903
    %v1128 = vpack.c.b16 %v908, %v904
    %v1129 = vpack.c.b16 %v909, %v905
    %v1130 = vpack.c.b16 %v914, %v910
    %v1131 = vpack.c.b16 %v915, %v911
    %v1132 = vpack.c.b16 %v916, %v912
    %v1133 = vpack.c.b16 %v917, %v913
    %v1134 = vpack.c.b16 %v922, %v918
    %v1135 = vpack.c.b16 %v923, %v919
    %v1136 = vpack.c.b16 %v924, %v920
    %v1137 = vpack.c.b16 %v925, %v921
    %v1138 = vpack.c.b16 %v930, %v926
    %v1139 = vpack.c.b16 %v931, %v927
    %v1140 = vpack.c.b16 %v932, %v928
    %v1141 = vpack.c.b16 %v933, %v929
    %v1142 = vpack.c.b16 %v938, %v934
    %v1143 = vpack.c.b16 %v939, %v935
    %v1144 = vpack.c.b16 %v940, %v936
    %v1145 = vpack.c.b16 %v941, %v937
    %v1146 = vpack.c.b16 %v946, %v942
    %v1147 = vpack.c.b16 %v947, %v943
    %v1148 = vpack.c.b16 %v948, %v944
    %v1149 = vpack.c.b16 %v949, %v945
    %v1150 = vpack.c.b16 %v954, %v950
    %v1151 = vpack.c.b16 %v955, %v951
    %v1152 = vpack.c.b16 %v956, %v952
    %v1153 = vpack.c.b16 %v957, %v953
    %vm1350 = vcmask 130048
    %v1352 = vsel %vm1350, %v163, 0
    %1354 = vmatpush.bf16.msra.mxu0 %v986
    %1355 = vmatpush.bf16.msra.mxu0 %v982
    %1356 = vmatpush.bf16.msra.mxu0 %v978
    %1357 = vmatpush.bf16.msra.mxu0 %v974
    %1358 = vmatpush.bf16.msra.mxu0 %v970
    %1359 = vmatpush.bf16.msra.mxu0 %v966
    %1360 = vmatpush.bf16.msra.mxu0 %v962
    %1361 = vmatpush.bf16.msra.mxu0 %v958
    %1362 = vmatmul.bf16.gmra.mxu0 %v157
    %v1363 = vpop.f32.mrf.mxu0
    %v1364 = vadd.f32 %v362, %v1363
    %v1365 = vpop.f32.mrf.mxu0
    %v1366 = vadd.f32 %v362, %v1365
    %1367 = vdwg.mxu0
    %1368 = vmatpush.bf16.msra.mxu0 %v1018
    %1369 = vmatpush.bf16.msra.mxu0 %v1014
    %1370 = vmatpush.bf16.msra.mxu0 %v1010
    %1371 = vmatpush.bf16.msra.mxu0 %v1006
    %1372 = vmatpush.bf16.msra.mxu0 %v1002
    %1373 = vmatpush.bf16.msra.mxu0 %v998
    %1374 = vmatpush.bf16.msra.mxu0 %v994
    %1375 = vmatpush.bf16.msra.mxu0 %v990
    %1376 = vmatmul.bf16.gmra.mxu0 %v158
    %v1377 = vpop.f32.mrf.mxu0
    %v1378 = vadd.f32 %v1364, %v1377
    %v1379 = vpop.f32.mrf.mxu0
    %v1380 = vadd.f32 %v1366, %v1379
    %1381 = vdwg.mxu0
    %1382 = vmatpush.bf16.msra.mxu0 %v1050
    %1383 = vmatpush.bf16.msra.mxu0 %v1046
    %1384 = vmatpush.bf16.msra.mxu0 %v1042
    %1385 = vmatpush.bf16.msra.mxu0 %v1038
    %1386 = vmatpush.bf16.msra.mxu0 %v1034
    %1387 = vmatpush.bf16.msra.mxu0 %v1030
    %1388 = vmatpush.bf16.msra.mxu0 %v1026
    %1389 = vmatpush.bf16.msra.mxu0 %v1022
    %1390 = vmatmul.bf16.gmra.mxu0 %v159
    %v1391 = vpop.f32.mrf.mxu0
    %v1392 = vadd.f32 %v1378, %v1391
    %v1393 = vpop.f32.mrf.mxu0
    %v1394 = vadd.f32 %v1380, %v1393
    %1395 = vdwg.mxu0
    %1396 = vmatpush.bf16.msra.mxu0 %v1082
    %1397 = vmatpush.bf16.msra.mxu0 %v1078
    %1398 = vmatpush.bf16.msra.mxu0 %v1074
    %1399 = vmatpush.bf16.msra.mxu0 %v1070
    %1400 = vmatpush.bf16.msra.mxu0 %v1066
    %1401 = vmatpush.bf16.msra.mxu0 %v1062
    %1402 = vmatpush.bf16.msra.mxu0 %v1058
    %1403 = vmatpush.bf16.msra.mxu0 %v1054
    %1404 = vmatmul.bf16.gmra.mxu0 %v160
    %v1405 = vpop.f32.mrf.mxu0
    %v1406 = vadd.f32 %v1392, %v1405
    %v1407 = vpop.f32.mrf.mxu0
    %v1408 = vadd.f32 %v1394, %v1407
    %1409 = vdwg.mxu0
    %1410 = vmatpush.bf16.msra.mxu0 %v1114
    %1411 = vmatpush.bf16.msra.mxu0 %v1110
    %1412 = vmatpush.bf16.msra.mxu0 %v1106
    %1413 = vmatpush.bf16.msra.mxu0 %v1102
    %1414 = vmatpush.bf16.msra.mxu0 %v1098
    %1415 = vmatpush.bf16.msra.mxu0 %v1094
    %1416 = vmatpush.bf16.msra.mxu0 %v1090
    %1417 = vmatpush.bf16.msra.mxu0 %v1086
    %1418 = vmatmul.bf16.gmra.mxu0 %v161
    %v1419 = vpop.f32.mrf.mxu0
    %v1420 = vadd.f32 %v1406, %v1419
    %v1421 = vpop.f32.mrf.mxu0
    %v1422 = vadd.f32 %v1408, %v1421
    %1423 = vdwg.mxu0
    %1424 = vmatpush.bf16.msra.mxu0 %v1146
    %1425 = vmatpush.bf16.msra.mxu0 %v1142
    %1426 = vmatpush.bf16.msra.mxu0 %v1138
    %1427 = vmatpush.bf16.msra.mxu0 %v1134
    %1428 = vmatpush.bf16.msra.mxu0 %v1130
    %1429 = vmatpush.bf16.msra.mxu0 %v1126
    %1430 = vmatpush.bf16.msra.mxu0 %v1122
    %1431 = vmatpush.bf16.msra.mxu0 %v1118
    %1432 = vmatmul.bf16.gmra.mxu0 %v162
    %v1433 = vpop.f32.mrf.mxu0
    %v1434 = vadd.f32 %v1420, %v1433
    %v1435 = vpop.f32.mrf.mxu0
    %v1436 = vadd.f32 %v1422, %v1435
    %1437 = vdwg.mxu0
    %1438 = vmatpush.bf16.msra.mxu0 0
    %1439 = vmatpush.bf16.msra.mxu0 0
    %1440 = vmatpush.bf16.msra.mxu0 0
    %1441 = vmatpush.bf16.msra.mxu0 0
    %1442 = vmatpush.bf16.msra.mxu0 0
    %1443 = vmatpush.bf16.msra.mxu0 0
    %1444 = vmatpush.bf16.msra.mxu0 0
    %1445 = vmatpush.bf16.msra.mxu0 %v1150
    %1446 = vmatmul.bf16.gmra.mxu0 %v1352
    %v1447 = vpop.f32.mrf.mxu0
    %v1448 = vadd.f32 %v1434, %v1447
    %v1449 = vpop.f32.mrf.mxu0
    %v1450 = vadd.f32 %v1436, %v1449
    %1451 = vdwg.mxu0
    %1452 = vmatpush.bf16.msra.mxu0 %v987
    %1453 = vmatpush.bf16.msra.mxu0 %v983
    %1454 = vmatpush.bf16.msra.mxu0 %v979
    %1455 = vmatpush.bf16.msra.mxu0 %v975
    %1456 = vmatpush.bf16.msra.mxu0 %v971
    %1457 = vmatpush.bf16.msra.mxu0 %v967
    %1458 = vmatpush.bf16.msra.mxu0 %v963
    %1459 = vmatpush.bf16.msra.mxu0 %v959
    %1460 = vmatmul.bf16.gmra.mxu0 %v157
    %v1461 = vpop.f32.mrf.mxu0
    %v1462 = vadd.f32 %v363, %v1461
    %v1463 = vpop.f32.mrf.mxu0
    %v1464 = vadd.f32 %v363, %v1463
    %1465 = vdwg.mxu0
    %1466 = vmatpush.bf16.msra.mxu0 %v1019
    %1467 = vmatpush.bf16.msra.mxu0 %v1015
    %1468 = vmatpush.bf16.msra.mxu0 %v1011
    %1469 = vmatpush.bf16.msra.mxu0 %v1007
    %1470 = vmatpush.bf16.msra.mxu0 %v1003
    %1471 = vmatpush.bf16.msra.mxu0 %v999
    %1472 = vmatpush.bf16.msra.mxu0 %v995
    %1473 = vmatpush.bf16.msra.mxu0 %v991
    %1474 = vmatmul.bf16.gmra.mxu0 %v158
    %v1475 = vpop.f32.mrf.mxu0
    %v1476 = vadd.f32 %v1462, %v1475
    %v1477 = vpop.f32.mrf.mxu0
    %v1478 = vadd.f32 %v1464, %v1477
    %1479 = vdwg.mxu0
    %1480 = vmatpush.bf16.msra.mxu0 %v1051
    %1481 = vmatpush.bf16.msra.mxu0 %v1047
    %1482 = vmatpush.bf16.msra.mxu0 %v1043
    %1483 = vmatpush.bf16.msra.mxu0 %v1039
    %1484 = vmatpush.bf16.msra.mxu0 %v1035
    %1485 = vmatpush.bf16.msra.mxu0 %v1031
    %1486 = vmatpush.bf16.msra.mxu0 %v1027
    %1487 = vmatpush.bf16.msra.mxu0 %v1023
    %1488 = vmatmul.bf16.gmra.mxu0 %v159
    %v1489 = vpop.f32.mrf.mxu0
    %v1490 = vadd.f32 %v1476, %v1489
    %v1491 = vpop.f32.mrf.mxu0
    %v1492 = vadd.f32 %v1478, %v1491
    %1493 = vdwg.mxu0
    %1494 = vmatpush.bf16.msra.mxu0 %v1083
    %1495 = vmatpush.bf16.msra.mxu0 %v1079
    %1496 = vmatpush.bf16.msra.mxu0 %v1075
    %1497 = vmatpush.bf16.msra.mxu0 %v1071
    %1498 = vmatpush.bf16.msra.mxu0 %v1067
    %1499 = vmatpush.bf16.msra.mxu0 %v1063
    %1500 = vmatpush.bf16.msra.mxu0 %v1059
    %1501 = vmatpush.bf16.msra.mxu0 %v1055
    %1502 = vmatmul.bf16.gmra.mxu0 %v160
    %v1503 = vpop.f32.mrf.mxu0
    %v1504 = vadd.f32 %v1490, %v1503
    %v1505 = vpop.f32.mrf.mxu0
    %v1506 = vadd.f32 %v1492, %v1505
    %1507 = vdwg.mxu0
    %1508 = vmatpush.bf16.msra.mxu0 %v1115
    %1509 = vmatpush.bf16.msra.mxu0 %v1111
    %1510 = vmatpush.bf16.msra.mxu0 %v1107
    %1511 = vmatpush.bf16.msra.mxu0 %v1103
    %1512 = vmatpush.bf16.msra.mxu0 %v1099
    %1513 = vmatpush.bf16.msra.mxu0 %v1095
    %1514 = vmatpush.bf16.msra.mxu0 %v1091
    %1515 = vmatpush.bf16.msra.mxu0 %v1087
    %1516 = vmatmul.bf16.gmra.mxu0 %v161
    %v1517 = vpop.f32.mrf.mxu0
    %v1518 = vadd.f32 %v1504, %v1517
    %v1519 = vpop.f32.mrf.mxu0
    %v1520 = vadd.f32 %v1506, %v1519
    %1521 = vdwg.mxu0
    %1522 = vmatpush.bf16.msra.mxu0 %v1147
    %1523 = vmatpush.bf16.msra.mxu0 %v1143
    %1524 = vmatpush.bf16.msra.mxu0 %v1139
    %1525 = vmatpush.bf16.msra.mxu0 %v1135
    %1526 = vmatpush.bf16.msra.mxu0 %v1131
    %1527 = vmatpush.bf16.msra.mxu0 %v1127
    %1528 = vmatpush.bf16.msra.mxu0 %v1123
    %1529 = vmatpush.bf16.msra.mxu0 %v1119
    %1530 = vmatmul.bf16.gmra.mxu0 %v162
    %v1531 = vpop.f32.mrf.mxu0
    %v1532 = vadd.f32 %v1518, %v1531
    %v1533 = vpop.f32.mrf.mxu0
    %v1534 = vadd.f32 %v1520, %v1533
    %1535 = vdwg.mxu0
    %1536 = vmatpush.bf16.msra.mxu0 0
    %1537 = vmatpush.bf16.msra.mxu0 0
    %1538 = vmatpush.bf16.msra.mxu0 0
    %1539 = vmatpush.bf16.msra.mxu0 0
    %1540 = vmatpush.bf16.msra.mxu0 0
    %1541 = vmatpush.bf16.msra.mxu0 0
    %1542 = vmatpush.bf16.msra.mxu0 0
    %1543 = vmatpush.bf16.msra.mxu0 %v1151
    %1544 = vmatmul.bf16.gmra.mxu0 %v1352
    %v1545 = vpop.f32.mrf.mxu0
    %v1546 = vadd.f32 %v1532, %v1545
    %v1547 = vpop.f32.mrf.mxu0
    %v1548 = vadd.f32 %v1534, %v1547
    %1549 = vdwg.mxu0
    %1550 = vmatpush.bf16.msra.mxu0 %v988
    %1551 = vmatpush.bf16.msra.mxu0 %v984
    %1552 = vmatpush.bf16.msra.mxu0 %v980
    %1553 = vmatpush.bf16.msra.mxu0 %v976
    %1554 = vmatpush.bf16.msra.mxu0 %v972
    %1555 = vmatpush.bf16.msra.mxu0 %v968
    %1556 = vmatpush.bf16.msra.mxu0 %v964
    %1557 = vmatpush.bf16.msra.mxu0 %v960
    %1558 = vmatmul.bf16.gmra.mxu0 %v157
    %v1559 = vpop.f32.mrf.mxu0
    %v1560 = vadd.f32 %v364, %v1559
    %v1561 = vpop.f32.mrf.mxu0
    %v1562 = vadd.f32 %v364, %v1561
    %1563 = vdwg.mxu0
    %1564 = vmatpush.bf16.msra.mxu0 %v1020
    %1565 = vmatpush.bf16.msra.mxu0 %v1016
    %1566 = vmatpush.bf16.msra.mxu0 %v1012
    %1567 = vmatpush.bf16.msra.mxu0 %v1008
    %1568 = vmatpush.bf16.msra.mxu0 %v1004
    %1569 = vmatpush.bf16.msra.mxu0 %v1000
    %1570 = vmatpush.bf16.msra.mxu0 %v996
    %1571 = vmatpush.bf16.msra.mxu0 %v992
    %1572 = vmatmul.bf16.gmra.mxu0 %v158
    %v1573 = vpop.f32.mrf.mxu0
    %v1574 = vadd.f32 %v1560, %v1573
    %v1575 = vpop.f32.mrf.mxu0
    %v1576 = vadd.f32 %v1562, %v1575
    %1577 = vdwg.mxu0
    %1578 = vmatpush.bf16.msra.mxu0 %v1052
    %1579 = vmatpush.bf16.msra.mxu0 %v1048
    %1580 = vmatpush.bf16.msra.mxu0 %v1044
    %1581 = vmatpush.bf16.msra.mxu0 %v1040
    %1582 = vmatpush.bf16.msra.mxu0 %v1036
    %1583 = vmatpush.bf16.msra.mxu0 %v1032
    %1584 = vmatpush.bf16.msra.mxu0 %v1028
    %1585 = vmatpush.bf16.msra.mxu0 %v1024
    %1586 = vmatmul.bf16.gmra.mxu0 %v159
    %v1587 = vpop.f32.mrf.mxu0
    %v1588 = vadd.f32 %v1574, %v1587
    %v1589 = vpop.f32.mrf.mxu0
    %v1590 = vadd.f32 %v1576, %v1589
    %1591 = vdwg.mxu0
    %1592 = vmatpush.bf16.msra.mxu0 %v1084
    %1593 = vmatpush.bf16.msra.mxu0 %v1080
    %1594 = vmatpush.bf16.msra.mxu0 %v1076
    %1595 = vmatpush.bf16.msra.mxu0 %v1072
    %1596 = vmatpush.bf16.msra.mxu0 %v1068
    %1597 = vmatpush.bf16.msra.mxu0 %v1064
    %1598 = vmatpush.bf16.msra.mxu0 %v1060
    %1599 = vmatpush.bf16.msra.mxu0 %v1056
    %1600 = vmatmul.bf16.gmra.mxu0 %v160
    %v1601 = vpop.f32.mrf.mxu0
    %v1602 = vadd.f32 %v1588, %v1601
    %v1603 = vpop.f32.mrf.mxu0
    %v1604 = vadd.f32 %v1590, %v1603
    %1605 = vdwg.mxu0
    %1606 = vmatpush.bf16.msra.mxu0 %v1116
    %1607 = vmatpush.bf16.msra.mxu0 %v1112
    %1608 = vmatpush.bf16.msra.mxu0 %v1108
    %1609 = vmatpush.bf16.msra.mxu0 %v1104
    %1610 = vmatpush.bf16.msra.mxu0 %v1100
    %1611 = vmatpush.bf16.msra.mxu0 %v1096
    %1612 = vmatpush.bf16.msra.mxu0 %v1092
    %1613 = vmatpush.bf16.msra.mxu0 %v1088
    %1614 = vmatmul.bf16.gmra.mxu0 %v161
    %v1615 = vpop.f32.mrf.mxu0
    %v1616 = vadd.f32 %v1602, %v1615
    %v1617 = vpop.f32.mrf.mxu0
    %v1618 = vadd.f32 %v1604, %v1617
    %1619 = vdwg.mxu0
    %1620 = vmatpush.bf16.msra.mxu0 %v1148
    %1621 = vmatpush.bf16.msra.mxu0 %v1144
    %1622 = vmatpush.bf16.msra.mxu0 %v1140
    %1623 = vmatpush.bf16.msra.mxu0 %v1136
    %1624 = vmatpush.bf16.msra.mxu0 %v1132
    %1625 = vmatpush.bf16.msra.mxu0 %v1128
    %1626 = vmatpush.bf16.msra.mxu0 %v1124
    %1627 = vmatpush.bf16.msra.mxu0 %v1120
    %1628 = vmatmul.bf16.gmra.mxu0 %v162
    %v1629 = vpop.f32.mrf.mxu0
    %v1630 = vadd.f32 %v1616, %v1629
    %v1631 = vpop.f32.mrf.mxu0
    %v1632 = vadd.f32 %v1618, %v1631
    %1633 = vdwg.mxu0
    %1634 = vmatpush.bf16.msra.mxu0 0
    %1635 = vmatpush.bf16.msra.mxu0 0
    %1636 = vmatpush.bf16.msra.mxu0 0
    %1637 = vmatpush.bf16.msra.mxu0 0
    %1638 = vmatpush.bf16.msra.mxu0 0
    %1639 = vmatpush.bf16.msra.mxu0 0
    %1640 = vmatpush.bf16.msra.mxu0 0
    %1641 = vmatpush.bf16.msra.mxu0 %v1152
    %1642 = vmatmul.bf16.gmra.mxu0 %v1352
    %v1643 = vpop.f32.mrf.mxu0
    %v1644 = vadd.f32 %v1630, %v1643
    %v1645 = vpop.f32.mrf.mxu0
    %v1646 = vadd.f32 %v1632, %v1645
    %1647 = vdwg.mxu0
    %1648 = vmatpush.bf16.msra.mxu0 %v989
    %1649 = vmatpush.bf16.msra.mxu0 %v985
    %1650 = vmatpush.bf16.msra.mxu0 %v981
    %1651 = vmatpush.bf16.msra.mxu0 %v977
    %1652 = vmatpush.bf16.msra.mxu0 %v973
    %1653 = vmatpush.bf16.msra.mxu0 %v969
    %1654 = vmatpush.bf16.msra.mxu0 %v965
    %1655 = vmatpush.bf16.msra.mxu0 %v961
    %1656 = vmatmul.bf16.gmra.mxu0 %v157
    %v1657 = vpop.f32.mrf.mxu0
    %v1658 = vadd.f32 %v365, %v1657
    %v1659 = vpop.f32.mrf.mxu0
    %v1660 = vadd.f32 %v365, %v1659
    %1661 = vdwg.mxu0
    %1662 = vmatpush.bf16.msra.mxu0 %v1021
    %1663 = vmatpush.bf16.msra.mxu0 %v1017
    %1664 = vmatpush.bf16.msra.mxu0 %v1013
    %1665 = vmatpush.bf16.msra.mxu0 %v1009
    %1666 = vmatpush.bf16.msra.mxu0 %v1005
    %1667 = vmatpush.bf16.msra.mxu0 %v1001
    %1668 = vmatpush.bf16.msra.mxu0 %v997
    %1669 = vmatpush.bf16.msra.mxu0 %v993
    %1670 = vmatmul.bf16.gmra.mxu0 %v158
    %v1671 = vpop.f32.mrf.mxu0
    %v1672 = vadd.f32 %v1658, %v1671
    %v1673 = vpop.f32.mrf.mxu0
    %v1674 = vadd.f32 %v1660, %v1673
    %1675 = vdwg.mxu0
    %1676 = vmatpush.bf16.msra.mxu0 %v1053
    %1677 = vmatpush.bf16.msra.mxu0 %v1049
    %1678 = vmatpush.bf16.msra.mxu0 %v1045
    %1679 = vmatpush.bf16.msra.mxu0 %v1041
    %1680 = vmatpush.bf16.msra.mxu0 %v1037
    %1681 = vmatpush.bf16.msra.mxu0 %v1033
    %1682 = vmatpush.bf16.msra.mxu0 %v1029
    %1683 = vmatpush.bf16.msra.mxu0 %v1025
    %1684 = vmatmul.bf16.gmra.mxu0 %v159
    %v1685 = vpop.f32.mrf.mxu0
    %v1686 = vadd.f32 %v1672, %v1685
    %v1687 = vpop.f32.mrf.mxu0
    %v1688 = vadd.f32 %v1674, %v1687
    %1689 = vdwg.mxu0
    %1690 = vmatpush.bf16.msra.mxu0 %v1085
    %1691 = vmatpush.bf16.msra.mxu0 %v1081
    %1692 = vmatpush.bf16.msra.mxu0 %v1077
    %1693 = vmatpush.bf16.msra.mxu0 %v1073
    %1694 = vmatpush.bf16.msra.mxu0 %v1069
    %1695 = vmatpush.bf16.msra.mxu0 %v1065
    %1696 = vmatpush.bf16.msra.mxu0 %v1061
    %1697 = vmatpush.bf16.msra.mxu0 %v1057
    %1698 = vmatmul.bf16.gmra.mxu0 %v160
    %v1699 = vpop.f32.mrf.mxu0
    %v1700 = vadd.f32 %v1686, %v1699
    %v1701 = vpop.f32.mrf.mxu0
    %v1702 = vadd.f32 %v1688, %v1701
    %1703 = vdwg.mxu0
    %1704 = vmatpush.bf16.msra.mxu0 %v1117
    %1705 = vmatpush.bf16.msra.mxu0 %v1113
    %1706 = vmatpush.bf16.msra.mxu0 %v1109
    %1707 = vmatpush.bf16.msra.mxu0 %v1105
    %1708 = vmatpush.bf16.msra.mxu0 %v1101
    %1709 = vmatpush.bf16.msra.mxu0 %v1097
    %1710 = vmatpush.bf16.msra.mxu0 %v1093
    %1711 = vmatpush.bf16.msra.mxu0 %v1089
    %1712 = vmatmul.bf16.gmra.mxu0 %v161
    %v1713 = vpop.f32.mrf.mxu0
    %v1714 = vadd.f32 %v1700, %v1713
    %v1715 = vpop.f32.mrf.mxu0
    %v1716 = vadd.f32 %v1702, %v1715
    %1717 = vdwg.mxu0
    %1718 = vmatpush.bf16.msra.mxu0 %v1149
    %1719 = vmatpush.bf16.msra.mxu0 %v1145
    %1720 = vmatpush.bf16.msra.mxu0 %v1141
    %1721 = vmatpush.bf16.msra.mxu0 %v1137
    %1722 = vmatpush.bf16.msra.mxu0 %v1133
    %1723 = vmatpush.bf16.msra.mxu0 %v1129
    %1724 = vmatpush.bf16.msra.mxu0 %v1125
    %1725 = vmatpush.bf16.msra.mxu0 %v1121
    %1726 = vmatmul.bf16.gmra.mxu0 %v162
    %v1727 = vpop.f32.mrf.mxu0
    %v1728 = vadd.f32 %v1714, %v1727
    %v1729 = vpop.f32.mrf.mxu0
    %v1730 = vadd.f32 %v1716, %v1729
    %1731 = vdwg.mxu0
    %1732 = vmatpush.bf16.msra.mxu0 0
    %1733 = vmatpush.bf16.msra.mxu0 0
    %1734 = vmatpush.bf16.msra.mxu0 0
    %1735 = vmatpush.bf16.msra.mxu0 0
    %1736 = vmatpush.bf16.msra.mxu0 0
    %1737 = vmatpush.bf16.msra.mxu0 0
    %1738 = vmatpush.bf16.msra.mxu0 0
    %1739 = vmatpush.bf16.msra.mxu0 %v1153
    %1740 = vmatmul.bf16.gmra.mxu0 %v1352
    %v1741 = vpop.f32.mrf.mxu0
    %v1742 = vadd.f32 %v1728, %v1741
    %v1743 = vpop.f32.mrf.mxu0
    %v1744 = vadd.f32 %v1730, %v1743
    %1745 = vdwg.mxu0
    %v1746 = vmax.f32 %v1448, 0.0
    %v1747 = vmax.f32 %v1546, 0.0
    %v1748 = vmax.f32 %v1644, 0.0
    %v1749 = vmax.f32 %v1742, 0.0
    %v1750 = vmax.f32 %v1450, 0.0
    %v1751 = vmax.f32 %v1548, 0.0
    %v1752 = vmax.f32 %v1646, 0.0
    %v1753 = vmax.f32 %v1744, 0.0
    %v1754 = vpack.c.bf16 %v1750, %v1746
    %v1755 = vpack.c.bf16 %v1751, %v1747
    %v1756 = vpack.c.bf16 %v1752, %v1748
    %v1757 = vpack.c.bf16 %v1753, %v1749
    %v1758 = vld [vmem:[#allocation4] sm:$0xff]
    %v1759 = vld [vmem:[#allocation4 + $0x8] sm:$0xff]
    %v1760 = vld [vmem:[#allocation4 + $0x10] sm:$0xff]
    %v1761 = vld [vmem:[#allocation4 + $0x18] sm:$0xff]
    %v1762 = vld [vmem:[#allocation4 + $0x20] sm:$0xff]
    %v1763 = vld [vmem:[#allocation4 + $0x28] sm:$0xff]
    %v1764 = vld [vmem:[#allocation4 + $0x30] sm:$0xff]
    %v1765 = vld [vmem:[#allocation4 + $0x38] sm:$0xff]
    %v1766 = vld [vmem:[#allocation4 + $0x40] sm:$0xff]
    %v1767 = vld [vmem:[#allocation4 + $0x48] sm:$0xff]
    %v1768 = vld [vmem:[#allocation4 + $0x50] sm:$0xff]
    %v1769 = vld [vmem:[#allocation4 + $0x58] sm:$0xff]
    %v1770 = vld [vmem:[#allocation4 + $0x60] sm:$0xff]
    %v1771 = vld [vmem:[#allocation4 + $0x68] sm:$0xff]
    %v1772 = vld [vmem:[#allocation4 + $0x70] sm:$0xff]
    %v1773 = vld [vmem:[#allocation4 + $0x78] sm:$0xff]
    %v1774 = vld [vmem:[#allocation4 + $0x80] sm:$0xff]
    %v1775 = vld [vmem:[#allocation4 + $0x88] sm:$0xff]
    %v1776 = vld [vmem:[#allocation4 + $0x90] sm:$0xff]
    %v1777 = vld [vmem:[#allocation4 + $0x98] sm:$0xff]
    %v1778 = vld [vmem:[#allocation4 + $0xa0] sm:$0xff]
    %v1779 = vld [vmem:[#allocation4 + $0xa8] sm:$0xff]
    %v1780 = vld [vmem:[#allocation4 + $0xb0] sm:$0xff]
    %v1781 = vld [vmem:[#allocation4 + $0xb8] sm:$0xff]
    %v1782 = vld [vmem:[#allocation4 + $0xc0] sm:$0xff]
    %v1783 = vld [vmem:[#allocation4 + $0xc8] sm:$0xff]
    %v1784 = vld [vmem:[#allocation4 + $0xd0] sm:$0xff]
    %v1785 = vld [vmem:[#allocation4 + $0xd8] sm:$0xff]
    %v1786 = vld [vmem:[#allocation4 + $0xe0] sm:$0xff]
    %v1787 = vld [vmem:[#allocation4 + $0xe8] sm:$0xff]
    %v1788 = vld [vmem:[#allocation4 + $0xf0] sm:$0xff]
    %v1789 = vld [vmem:[#allocation4 + $0xf8] sm:$0xff]
    %v1790 = vld [vmem:[#allocation4 + $0x100] sm:$0xff]
    %v1791 = vld [vmem:[#allocation4 + $0x108] sm:$0xff]
    %v1792 = vld [vmem:[#allocation4 + $0x110] sm:$0xff]
    %v1793 = vld [vmem:[#allocation4 + $0x118] sm:$0xff]
    %v1794 = vld [vmem:[#allocation4 + $0x120] sm:$0xff]
    %v1795 = vld [vmem:[#allocation4 + $0x128] sm:$0xff]
    %v1796 = vld [vmem:[#allocation4 + $0x130] sm:$0xff]
    %v1797 = vld [vmem:[#allocation4 + $0x138] sm:$0xff]
    %v1798 = vld [vmem:[#allocation4 + $0x140] sm:$0xff]
    %v1799 = vld [vmem:[#allocation4 + $0x148] sm:$0xff]
    %v1800 = vld [vmem:[#allocation4 + $0x150] sm:$0xff]
    %v1801 = vld [vmem:[#allocation4 + $0x158] sm:$0xff]
    %v1802 = vld [vmem:[#allocation4 + $0x160] sm:$0xff]
    %v1803 = vld [vmem:[#allocation4 + $0x168] sm:$0xff]
    %v1804 = vld [vmem:[#allocation4 + $0x170] sm:$0xff]
    %v1805 = vld [vmem:[#allocation4 + $0x178] sm:$0xff]
    %v1806 = vld [vmem:[#allocation4 + $0x180] sm:$0xff]
    %v1807 = vld [vmem:[#allocation4 + $0x188] sm:$0xff]
    %v1808 = vld [vmem:[#allocation4 + $0x190] sm:$0xff]
    %v1809 = vld [vmem:[#allocation4 + $0x198] sm:$0xff]
    %v1810 = vld [vmem:[#allocation4 + $0x1a0] sm:$0xff]
    %v1811 = vld [vmem:[#allocation4 + $0x1a8] sm:$0xff]
    %v1812 = vld [vmem:[#allocation4 + $0x1b0] sm:$0xff]
    %v1813 = vld [vmem:[#allocation4 + $0x1b8] sm:$0xff]
    %v1814 = vld [vmem:[#allocation4 + $0x1c0] sm:$0xff]
    %v1815 = vld [vmem:[#allocation4 + $0x1c8] sm:$0xff]
    %v1816 = vld [vmem:[#allocation4 + $0x1d0] sm:$0xff]
    %v1817 = vld [vmem:[#allocation4 + $0x1d8] sm:$0xff]
    %v1818 = vld [vmem:[#allocation4 + $0x1e0] sm:$0xff]
    %v1819 = vld [vmem:[#allocation4 + $0x1e8] sm:$0xff]
    %v1820 = vld [vmem:[#allocation4 + $0x1f0] sm:$0xff]
    %v1821 = vld [vmem:[#allocation4 + $0x1f8] sm:$0xff]
    %v1822 = vld [vmem:[#allocation4 + $0x200] sm:$0xff]
    %v1823 = vld [vmem:[#allocation4 + $0x208] sm:$0xff]
    %v1824 = vld [vmem:[#allocation4 + $0x210] sm:$0xff]
    %v1825 = vld [vmem:[#allocation4 + $0x218] sm:$0xff]
    %v1826 = vld [vmem:[#allocation4 + $0x220] sm:$0xff]
    %v1827 = vld [vmem:[#allocation4 + $0x228] sm:$0xff]
    %v1828 = vld [vmem:[#allocation4 + $0x230] sm:$0xff]
    %v1829 = vld [vmem:[#allocation4 + $0x238] sm:$0xff]
    %v1830 = vld [vmem:[#allocation4 + $0x240] sm:$0xff]
    %v1831 = vld [vmem:[#allocation4 + $0x248] sm:$0xff]
    %v1832 = vld [vmem:[#allocation4 + $0x250] sm:$0xff]
    %v1833 = vld [vmem:[#allocation4 + $0x258] sm:$0xff]
    %v1834 = vld [vmem:[#allocation4 + $0x260] sm:$0xff]
    %v1835 = vld [vmem:[#allocation4 + $0x268] sm:$0xff]
    %v1836 = vld [vmem:[#allocation4 + $0x270] sm:$0xff]
    %v1837 = vld [vmem:[#allocation4 + $0x278] sm:$0xff]
    %v1838 = vld [vmem:[#allocation4 + $0x280] sm:$0xff]
    %v1839 = vld [vmem:[#allocation4 + $0x288] sm:$0xff]
    %v1840 = vld [vmem:[#allocation4 + $0x290] sm:$0xff]
    %v1841 = vld [vmem:[#allocation4 + $0x298] sm:$0xff]
    %v1842 = vld [vmem:[#allocation4 + $0x2a0] sm:$0xff]
    %v1843 = vld [vmem:[#allocation4 + $0x2a8] sm:$0xff]
    %v1844 = vld [vmem:[#allocation4 + $0x2b0] sm:$0xff]
    %v1845 = vld [vmem:[#allocation4 + $0x2b8] sm:$0xff]
    %v1846 = vld [vmem:[#allocation4 + $0x2c0] sm:$0xff]
    %v1847 = vld [vmem:[#allocation4 + $0x2c8] sm:$0xff]
    %v1848 = vld [vmem:[#allocation4 + $0x2d0] sm:$0xff]
    %v1849 = vld [vmem:[#allocation4 + $0x2d8] sm:$0xff]
    %v1850 = vld [vmem:[#allocation4 + $0x2e0] sm:$0xff]
    %v1851 = vld [vmem:[#allocation4 + $0x2e8] sm:$0xff]
    %v1852 = vld [vmem:[#allocation4 + $0x2f0] sm:$0xff]
    %v1853 = vld [vmem:[#allocation4 + $0x2f8] sm:$0xff]
    %v1854 = vld [vmem:[#allocation4 + $0x300] sm:$0xff]
    %v1855 = vld [vmem:[#allocation4 + $0x308] sm:$0xff]
    %v1856 = vld [vmem:[#allocation4 + $0x310] sm:$0xff]
    %v1857 = vld [vmem:[#allocation4 + $0x318] sm:$0xff]
    %v1858 = vld [vmem:[#allocation4 + $0x320] sm:$0xff]
    %v1859 = vld [vmem:[#allocation4 + $0x328] sm:$0xff]
    %v1860 = vld [vmem:[#allocation4 + $0x330] sm:$0xff]
    %v1861 = vld [vmem:[#allocation4 + $0x338] sm:$0xff]
    %v1862 = vld [vmem:[#allocation4 + $0x340] sm:$0xff]
    %v1863 = vld [vmem:[#allocation4 + $0x348] sm:$0xff]
    %v1864 = vld [vmem:[#allocation4 + $0x350] sm:$0xff]
    %v1865 = vld [vmem:[#allocation4 + $0x358] sm:$0xff]
    %v1866 = vld [vmem:[#allocation4 + $0x360] sm:$0xff]
    %v1867 = vld [vmem:[#allocation4 + $0x368] sm:$0xff]
    %v1868 = vld [vmem:[#allocation4 + $0x370] sm:$0xff]
    %v1869 = vld [vmem:[#allocation4 + $0x378] sm:$0xff]
    %v1870 = vld [vmem:[#allocation4 + $0x380] sm:$0xff]
    %v1871 = vld [vmem:[#allocation4 + $0x388] sm:$0xff]
    %v1872 = vld [vmem:[#allocation4 + $0x390] sm:$0xff]
    %v1873 = vld [vmem:[#allocation4 + $0x398] sm:$0xff]
    %v1874 = vld [vmem:[#allocation4 + $0x3a0] sm:$0xff]
    %v1875 = vld [vmem:[#allocation4 + $0x3a8] sm:$0xff]
    %v1876 = vld [vmem:[#allocation4 + $0x3b0] sm:$0xff]
    %v1877 = vld [vmem:[#allocation4 + $0x3b8] sm:$0xff]
    %v1878 = vld [vmem:[#allocation4 + $0x3c0] sm:$0xff]
    %v1879 = vld [vmem:[#allocation4 + $0x3c8] sm:$0xff]
    %v1880 = vld [vmem:[#allocation4 + $0x3d0] sm:$0xff]
    %v1881 = vld [vmem:[#allocation4 + $0x3d8] sm:$0xff]
    %v1882 = vld [vmem:[#allocation4 + $0x3e0] sm:$0xff]
    %v1883 = vld [vmem:[#allocation4 + $0x3e8] sm:$0xff]
    %v1884 = vld [vmem:[#allocation4 + $0x3f0] sm:$0xff]
    %v1885 = vld [vmem:[#allocation4 + $0x3f8] sm:$0xff]
    %v1886 = vld [vmem:[%s4] sm:$0xf]
    %v1888 = vperm.slane %v1886, 0
    %v1889 = vperm.slane %v1886, 1
    %v1890 = vperm.slane %v1886, 2
    %v1891 = vperm.slane %v1886, 3
    %v2024 = vunpack.c.l.b16 %v1758
    %v2025 = vunpack.c.h.b16 %v1758
    %v2026 = vunpack.c.l.b16 %v1759
    %v2027 = vunpack.c.h.b16 %v1759
    %v2028 = vunpack.c.l.b16 %v1760
    %v2029 = vunpack.c.h.b16 %v1760
    %v2030 = vunpack.c.l.b16 %v1761
    %v2031 = vunpack.c.h.b16 %v1761
    %v2032 = vunpack.c.l.b16 %v1762
    %v2033 = vunpack.c.h.b16 %v1762
    %v2034 = vunpack.c.l.b16 %v1763
    %v2035 = vunpack.c.h.b16 %v1763
    %v2036 = vunpack.c.l.b16 %v1764
    %v2037 = vunpack.c.h.b16 %v1764
    %v2038 = vunpack.c.l.b16 %v1765
    %v2039 = vunpack.c.h.b16 %v1765
    %v2040 = vunpack.c.l.b16 %v1766
    %v2041 = vunpack.c.h.b16 %v1766
    %v2042 = vunpack.c.l.b16 %v1767
    %v2043 = vunpack.c.h.b16 %v1767
    %v2044 = vunpack.c.l.b16 %v1768
    %v2045 = vunpack.c.h.b16 %v1768
    %v2046 = vunpack.c.l.b16 %v1769
    %v2047 = vunpack.c.h.b16 %v1769
    %v2048 = vunpack.c.l.b16 %v1770
    %v2049 = vunpack.c.h.b16 %v1770
    %v2050 = vunpack.c.l.b16 %v1771
    %v2051 = vunpack.c.h.b16 %v1771
    %v2052 = vunpack.c.l.b16 %v1772
    %v2053 = vunpack.c.h.b16 %v1772
    %v2054 = vunpack.c.l.b16 %v1773
    %v2055 = vunpack.c.h.b16 %v1773
    %v2056 = vunpack.c.l.b16 %v1774
    %v2057 = vunpack.c.h.b16 %v1774
    %v2058 = vunpack.c.l.b16 %v1775
    %v2059 = vunpack.c.h.b16 %v1775
    %v2060 = vunpack.c.l.b16 %v1776
    %v2061 = vunpack.c.h.b16 %v1776
    %v2062 = vunpack.c.l.b16 %v1777
    %v2063 = vunpack.c.h.b16 %v1777
    %v2064 = vunpack.c.l.b16 %v1778
    %v2065 = vunpack.c.h.b16 %v1778
    %v2066 = vunpack.c.l.b16 %v1779
    %v2067 = vunpack.c.h.b16 %v1779
    %v2068 = vunpack.c.l.b16 %v1780
    %v2069 = vunpack.c.h.b16 %v1780
    %v2070 = vunpack.c.l.b16 %v1781
    %v2071 = vunpack.c.h.b16 %v1781
    %v2072 = vunpack.c.l.b16 %v1782
    %v2073 = vunpack.c.h.b16 %v1782
    %v2074 = vunpack.c.l.b16 %v1783
    %v2075 = vunpack.c.h.b16 %v1783
    %v2076 = vunpack.c.l.b16 %v1784
    %v2077 = vunpack.c.h.b16 %v1784
    %v2078 = vunpack.c.l.b16 %v1785
    %v2079 = vunpack.c.h.b16 %v1785
    %v2080 = vunpack.c.l.b16 %v1786
    %v2081 = vunpack.c.h.b16 %v1786
    %v2082 = vunpack.c.l.b16 %v1787
    %v2083 = vunpack.c.h.b16 %v1787
    %v2084 = vunpack.c.l.b16 %v1788
    %v2085 = vunpack.c.h.b16 %v1788
    %v2086 = vunpack.c.l.b16 %v1789
    %v2087 = vunpack.c.h.b16 %v1789
    %v2088 = vunpack.c.l.b16 %v1790
    %v2089 = vunpack.c.h.b16 %v1790
    %v2090 = vunpack.c.l.b16 %v1791
    %v2091 = vunpack.c.h.b16 %v1791
    %v2092 = vunpack.c.l.b16 %v1792
    %v2093 = vunpack.c.h.b16 %v1792
    %v2094 = vunpack.c.l.b16 %v1793
    %v2095 = vunpack.c.h.b16 %v1793
    %v2096 = vunpack.c.l.b16 %v1794
    %v2097 = vunpack.c.h.b16 %v1794
    %v2098 = vunpack.c.l.b16 %v1795
    %v2099 = vunpack.c.h.b16 %v1795
    %v2100 = vunpack.c.l.b16 %v1796
    %v2101 = vunpack.c.h.b16 %v1796
    %v2102 = vunpack.c.l.b16 %v1797
    %v2103 = vunpack.c.h.b16 %v1797
    %v2104 = vunpack.c.l.b16 %v1798
    %v2105 = vunpack.c.h.b16 %v1798
    %v2106 = vunpack.c.l.b16 %v1799
    %v2107 = vunpack.c.h.b16 %v1799
    %v2108 = vunpack.c.l.b16 %v1800
    %v2109 = vunpack.c.h.b16 %v1800
    %v2110 = vunpack.c.l.b16 %v1801
    %v2111 = vunpack.c.h.b16 %v1801
    %v2112 = vunpack.c.l.b16 %v1802
    %v2113 = vunpack.c.h.b16 %v1802
    %v2114 = vunpack.c.l.b16 %v1803
    %v2115 = vunpack.c.h.b16 %v1803
    %v2116 = vunpack.c.l.b16 %v1804
    %v2117 = vunpack.c.h.b16 %v1804
    %v2118 = vunpack.c.l.b16 %v1805
    %v2119 = vunpack.c.h.b16 %v1805
    %v2120 = vunpack.c.l.b16 %v1806
    %v2121 = vunpack.c.h.b16 %v1806
    %v2122 = vunpack.c.l.b16 %v1807
    %v2123 = vunpack.c.h.b16 %v1807
    %v2124 = vunpack.c.l.b16 %v1808
    %v2125 = vunpack.c.h.b16 %v1808
    %v2126 = vunpack.c.l.b16 %v1809
    %v2127 = vunpack.c.h.b16 %v1809
    %v2128 = vunpack.c.l.b16 %v1810
    %v2129 = vunpack.c.h.b16 %v1810
    %v2130 = vunpack.c.l.b16 %v1811
    %v2131 = vunpack.c.h.b16 %v1811
    %v2132 = vunpack.c.l.b16 %v1812
    %v2133 = vunpack.c.h.b16 %v1812
    %v2134 = vunpack.c.l.b16 %v1813
    %v2135 = vunpack.c.h.b16 %v1813
    %v2136 = vunpack.c.l.b16 %v1814
    %v2137 = vunpack.c.h.b16 %v1814
    %v2138 = vunpack.c.l.b16 %v1815
    %v2139 = vunpack.c.h.b16 %v1815
    %v2140 = vunpack.c.l.b16 %v1816
    %v2141 = vunpack.c.h.b16 %v1816
    %v2142 = vunpack.c.l.b16 %v1817
    %v2143 = vunpack.c.h.b16 %v1817
    %v2144 = vunpack.c.l.b16 %v1818
    %v2145 = vunpack.c.h.b16 %v1818
    %v2146 = vunpack.c.l.b16 %v1819
    %v2147 = vunpack.c.h.b16 %v1819
    %v2148 = vunpack.c.l.b16 %v1820
    %v2149 = vunpack.c.h.b16 %v1820
    %v2150 = vunpack.c.l.b16 %v1821
    %v2151 = vunpack.c.h.b16 %v1821
    %v2152 = vunpack.c.l.b16 %v1822
    %v2153 = vunpack.c.h.b16 %v1822
    %v2154 = vunpack.c.l.b16 %v1823
    %v2155 = vunpack.c.h.b16 %v1823
    %v2156 = vunpack.c.l.b16 %v1824
    %v2157 = vunpack.c.h.b16 %v1824
    %v2158 = vunpack.c.l.b16 %v1825
    %v2159 = vunpack.c.h.b16 %v1825
    %v2160 = vunpack.c.l.b16 %v1826
    %v2161 = vunpack.c.h.b16 %v1826
    %v2162 = vunpack.c.l.b16 %v1827
    %v2163 = vunpack.c.h.b16 %v1827
    %v2164 = vunpack.c.l.b16 %v1828
    %v2165 = vunpack.c.h.b16 %v1828
    %v2166 = vunpack.c.l.b16 %v1829
    %v2167 = vunpack.c.h.b16 %v1829
    %v2168 = vunpack.c.l.b16 %v1830
    %v2169 = vunpack.c.h.b16 %v1830
    %v2170 = vunpack.c.l.b16 %v1831
    %v2171 = vunpack.c.h.b16 %v1831
    %v2172 = vunpack.c.l.b16 %v1832
    %v2173 = vunpack.c.h.b16 %v1832
    %v2174 = vunpack.c.l.b16 %v1833
    %v2175 = vunpack.c.h.b16 %v1833
    %v2176 = vunpack.c.l.b16 %v1834
    %v2177 = vunpack.c.h.b16 %v1834
    %v2178 = vunpack.c.l.b16 %v1835
    %v2179 = vunpack.c.h.b16 %v1835
    %v2180 = vunpack.c.l.b16 %v1836
    %v2181 = vunpack.c.h.b16 %v1836
    %v2182 = vunpack.c.l.b16 %v1837
    %v2183 = vunpack.c.h.b16 %v1837
    %v2184 = vunpack.c.l.b16 %v1838
    %v2185 = vunpack.c.h.b16 %v1838
    %v2186 = vunpack.c.l.b16 %v1839
    %v2187 = vunpack.c.h.b16 %v1839
    %v2188 = vunpack.c.l.b16 %v1840
    %v2189 = vunpack.c.h.b16 %v1840
    %v2190 = vunpack.c.l.b16 %v1841
    %v2191 = vunpack.c.h.b16 %v1841
    %v2192 = vunpack.c.l.b16 %v1842
    %v2193 = vunpack.c.h.b16 %v1842
    %v2194 = vunpack.c.l.b16 %v1843
    %v2195 = vunpack.c.h.b16 %v1843
    %v2196 = vunpack.c.l.b16 %v1844
    %v2197 = vunpack.c.h.b16 %v1844
    %v2198 = vunpack.c.l.b16 %v1845
    %v2199 = vunpack.c.h.b16 %v1845
    %v2200 = vunpack.c.l.b16 %v1846
    %v2201 = vunpack.c.h.b16 %v1846
    %v2202 = vunpack.c.l.b16 %v1847
    %v2203 = vunpack.c.h.b16 %v1847
    %v2204 = vunpack.c.l.b16 %v1848
    %v2205 = vunpack.c.h.b16 %v1848
    %v2206 = vunpack.c.l.b16 %v1849
    %v2207 = vunpack.c.h.b16 %v1849
    %v2208 = vunpack.c.l.b16 %v1850
    %v2209 = vunpack.c.h.b16 %v1850
    %v2210 = vunpack.c.l.b16 %v1851
    %v2211 = vunpack.c.h.b16 %v1851
    %v2212 = vunpack.c.l.b16 %v1852
    %v2213 = vunpack.c.h.b16 %v1852
    %v2214 = vunpack.c.l.b16 %v1853
    %v2215 = vunpack.c.h.b16 %v1853
    %v2216 = vunpack.c.l.b16 %v1854
    %v2217 = vunpack.c.h.b16 %v1854
    %v2218 = vunpack.c.l.b16 %v1855
    %v2219 = vunpack.c.h.b16 %v1855
    %v2220 = vunpack.c.l.b16 %v1856
    %v2221 = vunpack.c.h.b16 %v1856
    %v2222 = vunpack.c.l.b16 %v1857
    %v2223 = vunpack.c.h.b16 %v1857
    %v2224 = vunpack.c.l.b16 %v1858
    %v2225 = vunpack.c.h.b16 %v1858
    %v2226 = vunpack.c.l.b16 %v1859
    %v2227 = vunpack.c.h.b16 %v1859
    %v2228 = vunpack.c.l.b16 %v1860
    %v2229 = vunpack.c.h.b16 %v1860
    %v2230 = vunpack.c.l.b16 %v1861
    %v2231 = vunpack.c.h.b16 %v1861
    %v2232 = vunpack.c.l.b16 %v1862
    %v2233 = vunpack.c.h.b16 %v1862
    %v2234 = vunpack.c.l.b16 %v1863
    %v2235 = vunpack.c.h.b16 %v1863
    %v2236 = vunpack.c.l.b16 %v1864
    %v2237 = vunpack.c.h.b16 %v1864
    %v2238 = vunpack.c.l.b16 %v1865
    %v2239 = vunpack.c.h.b16 %v1865
    %v2240 = vunpack.c.l.b16 %v1866
    %v2241 = vunpack.c.h.b16 %v1866
    %v2242 = vunpack.c.l.b16 %v1867
    %v2243 = vunpack.c.h.b16 %v1867
    %v2244 = vunpack.c.l.b16 %v1868
    %v2245 = vunpack.c.h.b16 %v1868
    %v2246 = vunpack.c.l.b16 %v1869
    %v2247 = vunpack.c.h.b16 %v1869
    %v2248 = vunpack.c.l.b16 %v1870
    %v2249 = vunpack.c.h.b16 %v1870
    %v2250 = vunpack.c.l.b16 %v1871
    %v2251 = vunpack.c.h.b16 %v1871
    %v2252 = vunpack.c.l.b16 %v1872
    %v2253 = vunpack.c.h.b16 %v1872
    %v2254 = vunpack.c.l.b16 %v1873
    %v2255 = vunpack.c.h.b16 %v1873
    %v2256 = vunpack.c.l.b16 %v1874
    %v2257 = vunpack.c.h.b16 %v1874
    %v2258 = vunpack.c.l.b16 %v1875
    %v2259 = vunpack.c.h.b16 %v1875
    %v2260 = vunpack.c.l.b16 %v1876
    %v2261 = vunpack.c.h.b16 %v1876
    %v2262 = vunpack.c.l.b16 %v1877
    %v2263 = vunpack.c.h.b16 %v1877
    %v2264 = vunpack.c.l.b16 %v1878
    %v2265 = vunpack.c.h.b16 %v1878
    %v2266 = vunpack.c.l.b16 %v1879
    %v2267 = vunpack.c.h.b16 %v1879
    %v2268 = vunpack.c.l.b16 %v1880
    %v2269 = vunpack.c.h.b16 %v1880
    %v2270 = vunpack.c.l.b16 %v1881
    %v2271 = vunpack.c.h.b16 %v1881
    %v2272 = vunpack.c.l.b16 %v1882
    %v2273 = vunpack.c.h.b16 %v1882
    %v2274 = vunpack.c.l.b16 %v1883
    %v2275 = vunpack.c.h.b16 %v1883
    %v2276 = vunpack.c.l.b16 %v1884
    %v2277 = vunpack.c.h.b16 %v1884
    %v2278 = vunpack.c.l.b16 %v1885
    %v2279 = vunpack.c.h.b16 %v1885
    %v2280 = vpack.c.b16 %v2028, %v2024
    %v2281 = vpack.c.b16 %v2029, %v2025
    %v2282 = vpack.c.b16 %v2030, %v2026
    %v2283 = vpack.c.b16 %v2031, %v2027
    %v2284 = vpack.c.b16 %v2036, %v2032
    %v2285 = vpack.c.b16 %v2037, %v2033
    %v2286 = vpack.c.b16 %v2038, %v2034
    %v2287 = vpack.c.b16 %v2039, %v2035
    %v2288 = vpack.c.b16 %v2044, %v2040
    %v2289 = vpack.c.b16 %v2045, %v2041
    %v2290 = vpack.c.b16 %v2046, %v2042
    %v2291 = vpack.c.b16 %v2047, %v2043
    %v2292 = vpack.c.b16 %v2052, %v2048
    %v2293 = vpack.c.b16 %v2053, %v2049
    %v2294 = vpack.c.b16 %v2054, %v2050
    %v2295 = vpack.c.b16 %v2055, %v2051
    %v2296 = vpack.c.b16 %v2060, %v2056
    %v2297 = vpack.c.b16 %v2061, %v2057
    %v2298 = vpack.c.b16 %v2062, %v2058
    %v2299 = vpack.c.b16 %v2063, %v2059
    %v2300 = vpack.c.b16 %v2068, %v2064
    %v2301 = vpack.c.b16 %v2069, %v2065
    %v2302 = vpack.c.b16 %v2070, %v2066
    %v2303 = vpack.c.b16 %v2071, %v2067
    %v2304 = vpack.c.b16 %v2076, %v2072
    %v2305 = vpack.c.b16 %v2077, %v2073
    %v2306 = vpack.c.b16 %v2078, %v2074
    %v2307 = vpack.c.b16 %v2079, %v2075
    %v2308 = vpack.c.b16 %v2084, %v2080
    %v2309 = vpack.c.b16 %v2085, %v2081
    %v2310 = vpack.c.b16 %v2086, %v2082
    %v2311 = vpack.c.b16 %v2087, %v2083
    %v2312 = vpack.c.b16 %v2092, %v2088
    %v2313 = vpack.c.b16 %v2093, %v2089
    %v2314 = vpack.c.b16 %v2094, %v2090
    %v2315 = vpack.c.b16 %v2095, %v2091
    %v2316 = vpack.c.b16 %v2100, %v2096
    %v2317 = vpack.c.b16 %v2101, %v2097
    %v2318 = vpack.c.b16 %v2102, %v2098
    %v2319 = vpack.c.b16 %v2103, %v2099
    %v2320 = vpack.c.b16 %v2108, %v2104
    %v2321 = vpack.c.b16 %v2109, %v2105
    %v2322 = vpack.c.b16 %v2110, %v2106
    %v2323 = vpack.c.b16 %v2111, %v2107
    %v2324 = vpack.c.b16 %v2116, %v2112
    %v2325 = vpack.c.b16 %v2117, %v2113
    %v2326 = vpack.c.b16 %v2118, %v2114
    %v2327 = vpack.c.b16 %v2119, %v2115
    %v2328 = vpack.c.b16 %v2124, %v2120
    %v2329 = vpack.c.b16 %v2125, %v2121
    %v2330 = vpack.c.b16 %v2126, %v2122
    %v2331 = vpack.c.b16 %v2127, %v2123
    %v2332 = vpack.c.b16 %v2132, %v2128
    %v2333 = vpack.c.b16 %v2133, %v2129
    %v2334 = vpack.c.b16 %v2134, %v2130
    %v2335 = vpack.c.b16 %v2135, %v2131
    %v2336 = vpack.c.b16 %v2140, %v2136
    %v2337 = vpack.c.b16 %v2141, %v2137
    %v2338 = vpack.c.b16 %v2142, %v2138
    %v2339 = vpack.c.b16 %v2143, %v2139
    %v2340 = vpack.c.b16 %v2148, %v2144
    %v2341 = vpack.c.b16 %v2149, %v2145
    %v2342 = vpack.c.b16 %v2150, %v2146
    %v2343 = vpack.c.b16 %v2151, %v2147
    %v2344 = vpack.c.b16 %v2156, %v2152
    %v2345 = vpack.c.b16 %v2157, %v2153
    %v2346 = vpack.c.b16 %v2158, %v2154
    %v2347 = vpack.c.b16 %v2159, %v2155
    %v2348 = vpack.c.b16 %v2164, %v2160
    %v2349 = vpack.c.b16 %v2165, %v2161
    %v2350 = vpack.c.b16 %v2166, %v2162
    %v2351 = vpack.c.b16 %v2167, %v2163
    %v2352 = vpack.c.b16 %v2172, %v2168
    %v2353 = vpack.c.b16 %v2173, %v2169
    %v2354 = vpack.c.b16 %v2174, %v2170
    %v2355 = vpack.c.b16 %v2175, %v2171
    %v2356 = vpack.c.b16 %v2180, %v2176
    %v2357 = vpack.c.b16 %v2181, %v2177
    %v2358 = vpack.c.b16 %v2182, %v2178
    %v2359 = vpack.c.b16 %v2183, %v2179
    %v2360 = vpack.c.b16 %v2188, %v2184
    %v2361 = vpack.c.b16 %v2189, %v2185
    %v2362 = vpack.c.b16 %v2190, %v2186
    %v2363 = vpack.c.b16 %v2191, %v2187
    %v2364 = vpack.c.b16 %v2196, %v2192
    %v2365 = vpack.c.b16 %v2197, %v2193
    %v2366 = vpack.c.b16 %v2198, %v2194
    %v2367 = vpack.c.b16 %v2199, %v2195
    %v2368 = vpack.c.b16 %v2204, %v2200
    %v2369 = vpack.c.b16 %v2205, %v2201
    %v2370 = vpack.c.b16 %v2206, %v2202
    %v2371 = vpack.c.b16 %v2207, %v2203
    %v2372 = vpack.c.b16 %v2212, %v2208
    %v2373 = vpack.c.b16 %v2213, %v2209
    %v2374 = vpack.c.b16 %v2214, %v2210
    %v2375 = vpack.c.b16 %v2215, %v2211
    %v2376 = vpack.c.b16 %v2220, %v2216
    %v2377 = vpack.c.b16 %v2221, %v2217
    %v2378 = vpack.c.b16 %v2222, %v2218
    %v2379 = vpack.c.b16 %v2223, %v2219
    %v2380 = vpack.c.b16 %v2228, %v2224
    %v2381 = vpack.c.b16 %v2229, %v2225
    %v2382 = vpack.c.b16 %v2230, %v2226
    %v2383 = vpack.c.b16 %v2231, %v2227
    %v2384 = vpack.c.b16 %v2236, %v2232
    %v2385 = vpack.c.b16 %v2237, %v2233
    %v2386 = vpack.c.b16 %v2238, %v2234
    %v2387 = vpack.c.b16 %v2239, %v2235
    %v2388 = vpack.c.b16 %v2244, %v2240
    %v2389 = vpack.c.b16 %v2245, %v2241
    %v2390 = vpack.c.b16 %v2246, %v2242
    %v2391 = vpack.c.b16 %v2247, %v2243
    %v2392 = vpack.c.b16 %v2252, %v2248
    %v2393 = vpack.c.b16 %v2253, %v2249
    %v2394 = vpack.c.b16 %v2254, %v2250
    %v2395 = vpack.c.b16 %v2255, %v2251
    %v2396 = vpack.c.b16 %v2260, %v2256
    %v2397 = vpack.c.b16 %v2261, %v2257
    %v2398 = vpack.c.b16 %v2262, %v2258
    %v2399 = vpack.c.b16 %v2263, %v2259
    %v2400 = vpack.c.b16 %v2268, %v2264
    %v2401 = vpack.c.b16 %v2269, %v2265
    %v2402 = vpack.c.b16 %v2270, %v2266
    %v2403 = vpack.c.b16 %v2271, %v2267
    %v2404 = vpack.c.b16 %v2276, %v2272
    %v2405 = vpack.c.b16 %v2277, %v2273
    %v2406 = vpack.c.b16 %v2278, %v2274
    %v2407 = vpack.c.b16 %v2279, %v2275
    %2536 = vmatpush.bf16.msra.mxu0 %v2308
    %2537 = vmatpush.bf16.msra.mxu0 %v2304
    %2538 = vmatpush.bf16.msra.mxu0 %v2300
    %2539 = vmatpush.bf16.msra.mxu0 %v2296
    %2540 = vmatpush.bf16.msra.mxu0 %v2292
    %2541 = vmatpush.bf16.msra.mxu0 %v2288
    %2542 = vmatpush.bf16.msra.mxu0 %v2284
    %2543 = vmatpush.bf16.msra.mxu0 %v2280
    %2544 = vmatmul.bf16.gmra.mxu0 %v1754
    %v2545 = vpop.f32.mrf.mxu0
    %v2546 = vadd.f32 %v1888, %v2545
    %v2547 = vpop.f32.mrf.mxu0
    %v2548 = vadd.f32 %v1888, %v2547
    %2549 = vdwg.mxu0
    %2550 = vmatpush.bf16.msra.mxu0 %v2340
    %2551 = vmatpush.bf16.msra.mxu0 %v2336
    %2552 = vmatpush.bf16.msra.mxu0 %v2332
    %2553 = vmatpush.bf16.msra.mxu0 %v2328
    %2554 = vmatpush.bf16.msra.mxu0 %v2324
    %2555 = vmatpush.bf16.msra.mxu0 %v2320
    %2556 = vmatpush.bf16.msra.mxu0 %v2316
    %2557 = vmatpush.bf16.msra.mxu0 %v2312
    %2558 = vmatmul.bf16.gmra.mxu0 %v1755
    %v2559 = vpop.f32.mrf.mxu0
    %v2560 = vadd.f32 %v2546, %v2559
    %v2561 = vpop.f32.mrf.mxu0
    %v2562 = vadd.f32 %v2548, %v2561
    %2563 = vdwg.mxu0
    %2564 = vmatpush.bf16.msra.mxu0 %v2372
    %2565 = vmatpush.bf16.msra.mxu0 %v2368
    %2566 = vmatpush.bf16.msra.mxu0 %v2364
    %2567 = vmatpush.bf16.msra.mxu0 %v2360
    %2568 = vmatpush.bf16.msra.mxu0 %v2356
    %2569 = vmatpush.bf16.msra.mxu0 %v2352
    %2570 = vmatpush.bf16.msra.mxu0 %v2348
    %2571 = vmatpush.bf16.msra.mxu0 %v2344
    %2572 = vmatmul.bf16.gmra.mxu0 %v1756
    %v2573 = vpop.f32.mrf.mxu0
    %v2574 = vadd.f32 %v2560, %v2573
    %v2575 = vpop.f32.mrf.mxu0
    %v2576 = vadd.f32 %v2562, %v2575
    %2577 = vdwg.mxu0
    %2578 = vmatpush.bf16.msra.mxu0 %v2404
    %2579 = vmatpush.bf16.msra.mxu0 %v2400
    %2580 = vmatpush.bf16.msra.mxu0 %v2396
    %2581 = vmatpush.bf16.msra.mxu0 %v2392
    %2582 = vmatpush.bf16.msra.mxu0 %v2388
    %2583 = vmatpush.bf16.msra.mxu0 %v2384
    %2584 = vmatpush.bf16.msra.mxu0 %v2380
    %2585 = vmatpush.bf16.msra.mxu0 %v2376
    %2586 = vmatmul.bf16.gmra.mxu0 %v1757
    %v2587 = vpop.f32.mrf.mxu0
    %v2588 = vadd.f32 %v2574, %v2587
    %v2589 = vpop.f32.mrf.mxu0
    %v2590 = vadd.f32 %v2576, %v2589
    %2591 = vdwg.mxu0
    %2592 = vmatpush.bf16.msra.mxu0 %v2309
    %2593 = vmatpush.bf16.msra.mxu0 %v2305
    %2594 = vmatpush.bf16.msra.mxu0 %v2301
    %2595 = vmatpush.bf16.msra.mxu0 %v2297
    %2596 = vmatpush.bf16.msra.mxu0 %v2293
    %2597 = vmatpush.bf16.msra.mxu0 %v2289
    %2598 = vmatpush.bf16.msra.mxu0 %v2285
    %2599 = vmatpush.bf16.msra.mxu0 %v2281
    %2600 = vmatmul.bf16.gmra.mxu0 %v1754
    %v2601 = vpop.f32.mrf.mxu0
    %v2602 = vadd.f32 %v1889, %v2601
    %v2603 = vpop.f32.mrf.mxu0
    %v2604 = vadd.f32 %v1889, %v2603
    %2605 = vdwg.mxu0
    %2606 = vmatpush.bf16.msra.mxu0 %v2341
    %2607 = vmatpush.bf16.msra.mxu0 %v2337
    %2608 = vmatpush.bf16.msra.mxu0 %v2333
    %2609 = vmatpush.bf16.msra.mxu0 %v2329
    %2610 = vmatpush.bf16.msra.mxu0 %v2325
    %2611 = vmatpush.bf16.msra.mxu0 %v2321
    %2612 = vmatpush.bf16.msra.mxu0 %v2317
    %2613 = vmatpush.bf16.msra.mxu0 %v2313
    %2614 = vmatmul.bf16.gmra.mxu0 %v1755
    %v2615 = vpop.f32.mrf.mxu0
    %v2616 = vadd.f32 %v2602, %v2615
    %v2617 = vpop.f32.mrf.mxu0
    %v2618 = vadd.f32 %v2604, %v2617
    %2619 = vdwg.mxu0
    %2620 = vmatpush.bf16.msra.mxu0 %v2373
    %2621 = vmatpush.bf16.msra.mxu0 %v2369
    %2622 = vmatpush.bf16.msra.mxu0 %v2365
    %2623 = vmatpush.bf16.msra.mxu0 %v2361
    %2624 = vmatpush.bf16.msra.mxu0 %v2357
    %2625 = vmatpush.bf16.msra.mxu0 %v2353
    %2626 = vmatpush.bf16.msra.mxu0 %v2349
    %2627 = vmatpush.bf16.msra.mxu0 %v2345
    %2628 = vmatmul.bf16.gmra.mxu0 %v1756
    %v2629 = vpop.f32.mrf.mxu0
    %v2630 = vadd.f32 %v2616, %v2629
    %v2631 = vpop.f32.mrf.mxu0
    %v2632 = vadd.f32 %v2618, %v2631
    %2633 = vdwg.mxu0
    %2634 = vmatpush.bf16.msra.mxu0 %v2405
    %2635 = vmatpush.bf16.msra.mxu0 %v2401
    %2636 = vmatpush.bf16.msra.mxu0 %v2397
    %2637 = vmatpush.bf16.msra.mxu0 %v2393
    %2638 = vmatpush.bf16.msra.mxu0 %v2389
    %2639 = vmatpush.bf16.msra.mxu0 %v2385
    %2640 = vmatpush.bf16.msra.mxu0 %v2381
    %2641 = vmatpush.bf16.msra.mxu0 %v2377
    %2642 = vmatmul.bf16.gmra.mxu0 %v1757
    %v2643 = vpop.f32.mrf.mxu0
    %v2644 = vadd.f32 %v2630, %v2643
    %v2645 = vpop.f32.mrf.mxu0
    %v2646 = vadd.f32 %v2632, %v2645
    %2647 = vdwg.mxu0
    %2648 = vmatpush.bf16.msra.mxu0 %v2310
    %2649 = vmatpush.bf16.msra.mxu0 %v2306
    %2650 = vmatpush.bf16.msra.mxu0 %v2302
    %2651 = vmatpush.bf16.msra.mxu0 %v2298
    %2652 = vmatpush.bf16.msra.mxu0 %v2294
    %2653 = vmatpush.bf16.msra.mxu0 %v2290
    %2654 = vmatpush.bf16.msra.mxu0 %v2286
    %2655 = vmatpush.bf16.msra.mxu0 %v2282
    %2656 = vmatmul.bf16.gmra.mxu0 %v1754
    %v2657 = vpop.f32.mrf.mxu0
    %v2658 = vadd.f32 %v1890, %v2657
    %v2659 = vpop.f32.mrf.mxu0
    %v2660 = vadd.f32 %v1890, %v2659
    %2661 = vdwg.mxu0
    %2662 = vmatpush.bf16.msra.mxu0 %v2342
    %2663 = vmatpush.bf16.msra.mxu0 %v2338
    %2664 = vmatpush.bf16.msra.mxu0 %v2334
    %2665 = vmatpush.bf16.msra.mxu0 %v2330
    %2666 = vmatpush.bf16.msra.mxu0 %v2326
    %2667 = vmatpush.bf16.msra.mxu0 %v2322
    %2668 = vmatpush.bf16.msra.mxu0 %v2318
    %2669 = vmatpush.bf16.msra.mxu0 %v2314
    %2670 = vmatmul.bf16.gmra.mxu0 %v1755
    %v2671 = vpop.f32.mrf.mxu0
    %v2672 = vadd.f32 %v2658, %v2671
    %v2673 = vpop.f32.mrf.mxu0
    %v2674 = vadd.f32 %v2660, %v2673
    %2675 = vdwg.mxu0
    %2676 = vmatpush.bf16.msra.mxu0 %v2374
    %2677 = vmatpush.bf16.msra.mxu0 %v2370
    %2678 = vmatpush.bf16.msra.mxu0 %v2366
    %2679 = vmatpush.bf16.msra.mxu0 %v2362
    %2680 = vmatpush.bf16.msra.mxu0 %v2358
    %2681 = vmatpush.bf16.msra.mxu0 %v2354
    %2682 = vmatpush.bf16.msra.mxu0 %v2350
    %2683 = vmatpush.bf16.msra.mxu0 %v2346
    %2684 = vmatmul.bf16.gmra.mxu0 %v1756
    %v2685 = vpop.f32.mrf.mxu0
    %v2686 = vadd.f32 %v2672, %v2685
    %v2687 = vpop.f32.mrf.mxu0
    %v2688 = vadd.f32 %v2674, %v2687
    %2689 = vdwg.mxu0
    %2690 = vmatpush.bf16.msra.mxu0 %v2406
    %2691 = vmatpush.bf16.msra.mxu0 %v2402
    %2692 = vmatpush.bf16.msra.mxu0 %v2398
    %2693 = vmatpush.bf16.msra.mxu0 %v2394
    %2694 = vmatpush.bf16.msra.mxu0 %v2390
    %2695 = vmatpush.bf16.msra.mxu0 %v2386
    %2696 = vmatpush.bf16.msra.mxu0 %v2382
    %2697 = vmatpush.bf16.msra.mxu0 %v2378
    %2698 = vmatmul.bf16.gmra.mxu0 %v1757
    %v2699 = vpop.f32.mrf.mxu0
    %v2700 = vadd.f32 %v2686, %v2699
    %v2701 = vpop.f32.mrf.mxu0
    %v2702 = vadd.f32 %v2688, %v2701
    %2703 = vdwg.mxu0
    %2704 = vmatpush.bf16.msra.mxu0 %v2311
    %2705 = vmatpush.bf16.msra.mxu0 %v2307
    %2706 = vmatpush.bf16.msra.mxu0 %v2303
    %2707 = vmatpush.bf16.msra.mxu0 %v2299
    %2708 = vmatpush.bf16.msra.mxu0 %v2295
    %2709 = vmatpush.bf16.msra.mxu0 %v2291
    %2710 = vmatpush.bf16.msra.mxu0 %v2287
    %2711 = vmatpush.bf16.msra.mxu0 %v2283
    %2712 = vmatmul.bf16.gmra.mxu0 %v1754
    %v2713 = vpop.f32.mrf.mxu0
    %v2714 = vadd.f32 %v1891, %v2713
    %v2715 = vpop.f32.mrf.mxu0
    %v2716 = vadd.f32 %v1891, %v2715
    %2717 = vdwg.mxu0
    %2718 = vmatpush.bf16.msra.mxu0 %v2343
    %2719 = vmatpush.bf16.msra.mxu0 %v2339
    %2720 = vmatpush.bf16.msra.mxu0 %v2335
    %2721 = vmatpush.bf16.msra.mxu0 %v2331
    %2722 = vmatpush.bf16.msra.mxu0 %v2327
    %2723 = vmatpush.bf16.msra.mxu0 %v2323
    %2724 = vmatpush.bf16.msra.mxu0 %v2319
    %2725 = vmatpush.bf16.msra.mxu0 %v2315
    %2726 = vmatmul.bf16.gmra.mxu0 %v1755
    %v2727 = vpop.f32.mrf.mxu0
    %v2728 = vadd.f32 %v2714, %v2727
    %v2729 = vpop.f32.mrf.mxu0
    %v2730 = vadd.f32 %v2716, %v2729
    %2731 = vdwg.mxu0
    %2732 = vmatpush.bf16.msra.mxu0 %v2375
    %2733 = vmatpush.bf16.msra.mxu0 %v2371
    %2734 = vmatpush.bf16.msra.mxu0 %v2367
    %2735 = vmatpush.bf16.msra.mxu0 %v2363
    %2736 = vmatpush.bf16.msra.mxu0 %v2359
    %2737 = vmatpush.bf16.msra.mxu0 %v2355
    %2738 = vmatpush.bf16.msra.mxu0 %v2351
    %2739 = vmatpush.bf16.msra.mxu0 %v2347
    %2740 = vmatmul.bf16.gmra.mxu0 %v1756
    %v2741 = vpop.f32.mrf.mxu0
    %v2742 = vadd.f32 %v2728, %v2741
    %v2743 = vpop.f32.mrf.mxu0
    %v2744 = vadd.f32 %v2730, %v2743
    %2745 = vdwg.mxu0
    %2746 = vmatpush.bf16.msra.mxu0 %v2407
    %2747 = vmatpush.bf16.msra.mxu0 %v2403
    %2748 = vmatpush.bf16.msra.mxu0 %v2399
    %2749 = vmatpush.bf16.msra.mxu0 %v2395
    %2750 = vmatpush.bf16.msra.mxu0 %v2391
    %2751 = vmatpush.bf16.msra.mxu0 %v2387
    %2752 = vmatpush.bf16.msra.mxu0 %v2383
    %2753 = vmatpush.bf16.msra.mxu0 %v2379
    %2754 = vmatmul.bf16.gmra.mxu0 %v1757
    %v2755 = vpop.f32.mrf.mxu0
    %v2756 = vadd.f32 %v2742, %v2755
    %v2757 = vpop.f32.mrf.mxu0
    %v2758 = vadd.f32 %v2744, %v2757
    %2759 = vdwg.mxu0
    %v2760 = vmax.f32 %v2588, 0.0
    %v2761 = vmax.f32 %v2644, 0.0
    %v2762 = vmax.f32 %v2700, 0.0
    %v2763 = vmax.f32 %v2756, 0.0
    %v2764 = vmax.f32 %v2590, 0.0
    %v2765 = vmax.f32 %v2646, 0.0
    %v2766 = vmax.f32 %v2702, 0.0
    %v2767 = vmax.f32 %v2758, 0.0
    %v2768 = vpack.c.bf16 %v2764, %v2760
    %v2769 = vpack.c.bf16 %v2765, %v2761
    %v2770 = vpack.c.bf16 %v2766, %v2762
    %v2771 = vpack.c.bf16 %v2767, %v2763
    %v2772 = vld [vmem:[#allocation6] sm:$0xf]
    %v2773 = vld [vmem:[#allocation6 + $0x4] sm:$0xf]
    %v2774 = vld [vmem:[#allocation6 + $0x8] sm:$0xf]
    %v2775 = vld [vmem:[#allocation6 + $0xc] sm:$0xf]
    %v2776 = vld [vmem:[#allocation6 + $0x10] sm:$0xf]
    %v2777 = vld [vmem:[#allocation6 + $0x14] sm:$0xf]
    %v2778 = vld [vmem:[#allocation6 + $0x18] sm:$0xf]
    %v2779 = vld [vmem:[#allocation6 + $0x1c] sm:$0xf]
    %v2780 = vld [vmem:[#allocation6 + $0x20] sm:$0xf]
    %v2781 = vld [vmem:[#allocation6 + $0x24] sm:$0xf]
    %v2782 = vld [vmem:[#allocation6 + $0x28] sm:$0xf]
    %v2783 = vld [vmem:[#allocation6 + $0x2c] sm:$0xf]
    %v2784 = vld [vmem:[#allocation6 + $0x30] sm:$0xf]
    %v2785 = vld [vmem:[#allocation6 + $0x34] sm:$0xf]
    %v2786 = vld [vmem:[#allocation6 + $0x38] sm:$0xf]
    %v2787 = vld [vmem:[#allocation6 + $0x3c] sm:$0xf]
    %v2788 = vld [vmem:[#allocation6 + $0x40] sm:$0xf]
    %v2789 = vld [vmem:[#allocation6 + $0x44] sm:$0xf]
    %v2790 = vld [vmem:[#allocation6 + $0x48] sm:$0xf]
    %v2791 = vld [vmem:[#allocation6 + $0x4c] sm:$0xf]
    %v2792 = vld [vmem:[#allocation6 + $0x50] sm:$0xf]
    %v2793 = vld [vmem:[#allocation6 + $0x54] sm:$0xf]
    %v2794 = vld [vmem:[#allocation6 + $0x58] sm:$0xf]
    %v2795 = vld [vmem:[#allocation6 + $0x5c] sm:$0xf]
    %v2796 = vld [vmem:[#allocation6 + $0x60] sm:$0xf]
    %v2797 = vld [vmem:[#allocation6 + $0x64] sm:$0xf]
    %v2798 = vld [vmem:[#allocation6 + $0x68] sm:$0xf]
    %v2799 = vld [vmem:[#allocation6 + $0x6c] sm:$0xf]
    %v2800 = vld [vmem:[#allocation6 + $0x70] sm:$0xf]
    %v2801 = vld [vmem:[#allocation6 + $0x74] sm:$0xf]
    %v2802 = vld [vmem:[#allocation6 + $0x78] sm:$0xf]
    %v2803 = vld [vmem:[#allocation6 + $0x7c] sm:$0xf]
    %v2804 = vld [vmem:[#allocation6 + $0x80] sm:$0xf]
    %v2805 = vld [vmem:[#allocation6 + $0x84] sm:$0xf]
    %v2806 = vld [vmem:[#allocation6 + $0x88] sm:$0xf]
    %v2807 = vld [vmem:[#allocation6 + $0x8c] sm:$0xf]
    %v2808 = vld [vmem:[#allocation6 + $0x90] sm:$0xf]
    %v2809 = vld [vmem:[#allocation6 + $0x94] sm:$0xf]
    %v2810 = vld [vmem:[#allocation6 + $0x98] sm:$0xf]
    %v2811 = vld [vmem:[#allocation6 + $0x9c] sm:$0xf]
    %v2812 = vld [vmem:[#allocation6 + $0xa0] sm:$0xf]
    %v2813 = vld [vmem:[#allocation6 + $0xa4] sm:$0xf]
    %v2814 = vld [vmem:[#allocation6 + $0xa8] sm:$0xf]
    %v2815 = vld [vmem:[#allocation6 + $0xac] sm:$0xf]
    %v2816 = vld [vmem:[#allocation6 + $0xb0] sm:$0xf]
    %v2817 = vld [vmem:[#allocation6 + $0xb4] sm:$0xf]
    %v2818 = vld [vmem:[#allocation6 + $0xb8] sm:$0xf]
    %v2819 = vld [vmem:[#allocation6 + $0xbc] sm:$0xf]
    %v2820 = vld [vmem:[#allocation6 + $0xc0] sm:$0xf]
    %v2821 = vld [vmem:[#allocation6 + $0xc4] sm:$0xf]
    %v2822 = vld [vmem:[#allocation6 + $0xc8] sm:$0xf]
    %v2823 = vld [vmem:[#allocation6 + $0xcc] sm:$0xf]
    %v2824 = vld [vmem:[#allocation6 + $0xd0] sm:$0xf]
    %v2825 = vld [vmem:[#allocation6 + $0xd4] sm:$0xf]
    %v2826 = vld [vmem:[#allocation6 + $0xd8] sm:$0xf]
    %v2827 = vld [vmem:[#allocation6 + $0xdc] sm:$0xf]
    %v2828 = vld [vmem:[#allocation6 + $0xe0] sm:$0xf]
    %v2829 = vld [vmem:[#allocation6 + $0xe4] sm:$0xf]
    %v2830 = vld [vmem:[#allocation6 + $0xe8] sm:$0xf]
    %v2831 = vld [vmem:[#allocation6 + $0xec] sm:$0xf]
    %v2832 = vld [vmem:[#allocation6 + $0xf0] sm:$0xf]
    %v2833 = vld [vmem:[#allocation6 + $0xf4] sm:$0xf]
    %v2834 = vld [vmem:[#allocation6 + $0xf8] sm:$0xf]
    %v2835 = vld [vmem:[#allocation6 + $0xfc] sm:$0xf]
    %v2836 = vld [vmem:[%s6] sm:$0x1]
    %v2838 = vperm.slane %v2836, 0
    %v2904 = vunpack.c.l.b16 %v2772
    %v2905 = vunpack.c.l.b16 %v2773
    %v2906 = vunpack.c.l.b16 %v2774
    %v2907 = vunpack.c.l.b16 %v2775
    %v2908 = vunpack.c.l.b16 %v2776
    %v2909 = vunpack.c.l.b16 %v2777
    %v2910 = vunpack.c.l.b16 %v2778
    %v2911 = vunpack.c.l.b16 %v2779
    %v2912 = vunpack.c.l.b16 %v2780
    %v2913 = vunpack.c.l.b16 %v2781
    %v2914 = vunpack.c.l.b16 %v2782
    %v2915 = vunpack.c.l.b16 %v2783
    %v2916 = vunpack.c.l.b16 %v2784
    %v2917 = vunpack.c.l.b16 %v2785
    %v2918 = vunpack.c.l.b16 %v2786
    %v2919 = vunpack.c.l.b16 %v2787
    %v2920 = vunpack.c.l.b16 %v2788
    %v2921 = vunpack.c.l.b16 %v2789
    %v2922 = vunpack.c.l.b16 %v2790
    %v2923 = vunpack.c.l.b16 %v2791
    %v2924 = vunpack.c.l.b16 %v2792
    %v2925 = vunpack.c.l.b16 %v2793
    %v2926 = vunpack.c.l.b16 %v2794
    %v2927 = vunpack.c.l.b16 %v2795
    %v2928 = vunpack.c.l.b16 %v2796
    %v2929 = vunpack.c.l.b16 %v2797
    %v2930 = vunpack.c.l.b16 %v2798
    %v2931 = vunpack.c.l.b16 %v2799
    %v2932 = vunpack.c.l.b16 %v2800
    %v2933 = vunpack.c.l.b16 %v2801
    %v2934 = vunpack.c.l.b16 %v2802
    %v2935 = vunpack.c.l.b16 %v2803
    %v2936 = vunpack.c.l.b16 %v2804
    %v2937 = vunpack.c.l.b16 %v2805
    %v2938 = vunpack.c.l.b16 %v2806
    %v2939 = vunpack.c.l.b16 %v2807
    %v2940 = vunpack.c.l.b16 %v2808
    %v2941 = vunpack.c.l.b16 %v2809
    %v2942 = vunpack.c.l.b16 %v2810
    %v2943 = vunpack.c.l.b16 %v2811
    %v2944 = vunpack.c.l.b16 %v2812
    %v2945 = vunpack.c.l.b16 %v2813
    %v2946 = vunpack.c.l.b16 %v2814
    %v2947 = vunpack.c.l.b16 %v2815
    %v2948 = vunpack.c.l.b16 %v2816
    %v2949 = vunpack.c.l.b16 %v2817
    %v2950 = vunpack.c.l.b16 %v2818
    %v2951 = vunpack.c.l.b16 %v2819
    %v2952 = vunpack.c.l.b16 %v2820
    %v2953 = vunpack.c.l.b16 %v2821
    %v2954 = vunpack.c.l.b16 %v2822
    %v2955 = vunpack.c.l.b16 %v2823
    %v2956 = vunpack.c.l.b16 %v2824
    %v2957 = vunpack.c.l.b16 %v2825
    %v2958 = vunpack.c.l.b16 %v2826
    %v2959 = vunpack.c.l.b16 %v2827
    %v2960 = vunpack.c.l.b16 %v2828
    %v2961 = vunpack.c.l.b16 %v2829
    %v2962 = vunpack.c.l.b16 %v2830
    %v2963 = vunpack.c.l.b16 %v2831
    %v2964 = vunpack.c.l.b16 %v2832
    %v2965 = vunpack.c.l.b16 %v2833
    %v2966 = vunpack.c.l.b16 %v2834
    %v2967 = vunpack.c.l.b16 %v2835
    %v2968 = vpack.c.b16 %v2905, %v2904
    %v2969 = vpack.c.b16 %v2907, %v2906
    %v2970 = vpack.c.b16 %v2909, %v2908
    %v2971 = vpack.c.b16 %v2911, %v2910
    %v2972 = vpack.c.b16 %v2913, %v2912
    %v2973 = vpack.c.b16 %v2915, %v2914
    %v2974 = vpack.c.b16 %v2917, %v2916
    %v2975 = vpack.c.b16 %v2919, %v2918
    %v2976 = vpack.c.b16 %v2921, %v2920
    %v2977 = vpack.c.b16 %v2923, %v2922
    %v2978 = vpack.c.b16 %v2925, %v2924
    %v2979 = vpack.c.b16 %v2927, %v2926
    %v2980 = vpack.c.b16 %v2929, %v2928
    %v2981 = vpack.c.b16 %v2931, %v2930
    %v2982 = vpack.c.b16 %v2933, %v2932
    %v2983 = vpack.c.b16 %v2935, %v2934
    %v2984 = vpack.c.b16 %v2937, %v2936
    %v2985 = vpack.c.b16 %v2939, %v2938
    %v2986 = vpack.c.b16 %v2941, %v2940
    %v2987 = vpack.c.b16 %v2943, %v2942
    %v2988 = vpack.c.b16 %v2945, %v2944
    %v2989 = vpack.c.b16 %v2947, %v2946
    %v2990 = vpack.c.b16 %v2949, %v2948
    %v2991 = vpack.c.b16 %v2951, %v2950
    %v2992 = vpack.c.b16 %v2953, %v2952
    %v2993 = vpack.c.b16 %v2955, %v2954
    %v2994 = vpack.c.b16 %v2957, %v2956
    %v2995 = vpack.c.b16 %v2959, %v2958
    %v2996 = vpack.c.b16 %v2961, %v2960
    %v2997 = vpack.c.b16 %v2963, %v2962
    %v2998 = vpack.c.b16 %v2965, %v2964
    %v2999 = vpack.c.b16 %v2967, %v2966
    %3032 = vmatpush.bf16.msra.mxu0 %v2975
    %3033 = vmatpush.bf16.msra.mxu0 %v2974
    %3034 = vmatpush.bf16.msra.mxu0 %v2973
    %3035 = vmatpush.bf16.msra.mxu0 %v2972
    %3036 = vmatpush.bf16.msra.mxu0 %v2971
    %3037 = vmatpush.bf16.msra.mxu0 %v2970
    %3038 = vmatpush.bf16.msra.mxu0 %v2969
    %3039 = vmatpush.bf16.msra.mxu0 %v2968
    %3040 = vmatmul.bf16.gmra.mxu0 %v2768
    %v3041 = vpop.f32.mrf.mxu0
    %v3042 = vadd.f32 %v2838, %v3041
    %v3043 = vpop.f32.mrf.mxu0
    %v3044 = vadd.f32 %v2838, %v3043
    %3045 = vdwg.mxu0
    %3046 = vmatpush.bf16.msra.mxu0 %v2983
    %3047 = vmatpush.bf16.msra.mxu0 %v2982
    %3048 = vmatpush.bf16.msra.mxu0 %v2981
    %3049 = vmatpush.bf16.msra.mxu0 %v2980
    %3050 = vmatpush.bf16.msra.mxu0 %v2979
    %3051 = vmatpush.bf16.msra.mxu0 %v2978
    %3052 = vmatpush.bf16.msra.mxu0 %v2977
    %3053 = vmatpush.bf16.msra.mxu0 %v2976
    %3054 = vmatmul.bf16.gmra.mxu0 %v2769
    %v3055 = vpop.f32.mrf.mxu0
    %v3056 = vadd.f32 %v3042, %v3055
    %v3057 = vpop.f32.mrf.mxu0
    %v3058 = vadd.f32 %v3044, %v3057
    %3059 = vdwg.mxu0
    %3060 = vmatpush.bf16.msra.mxu0 %v2991
    %3061 = vmatpush.bf16.msra.mxu0 %v2990
    %3062 = vmatpush.bf16.msra.mxu0 %v2989
    %3063 = vmatpush.bf16.msra.mxu0 %v2988
    %3064 = vmatpush.bf16.msra.mxu0 %v2987
    %3065 = vmatpush.bf16.msra.mxu0 %v2986
    %3066 = vmatpush.bf16.msra.mxu0 %v2985
    %3067 = vmatpush.bf16.msra.mxu0 %v2984
    %3068 = vmatmul.bf16.gmra.mxu0 %v2770
    %v3069 = vpop.f32.mrf.mxu0
    %v3070 = vadd.f32 %v3056, %v3069
    %v3071 = vpop.f32.mrf.mxu0
    %v3072 = vadd.f32 %v3058, %v3071
    %3073 = vdwg.mxu0
    %3074 = vmatpush.bf16.msra.mxu0 %v2999
    %3075 = vmatpush.bf16.msra.mxu0 %v2998
    %3076 = vmatpush.bf16.msra.mxu0 %v2997
    %3077 = vmatpush.bf16.msra.mxu0 %v2996
    %3078 = vmatpush.bf16.msra.mxu0 %v2995
    %3079 = vmatpush.bf16.msra.mxu0 %v2994
    %3080 = vmatpush.bf16.msra.mxu0 %v2993
    %3081 = vmatpush.bf16.msra.mxu0 %v2992
    %3082 = vmatmul.bf16.gmra.mxu0 %v2771
    %v3083 = vpop.f32.mrf.mxu0
    %v3084 = vadd.f32 %v3070, %v3083
    %v3085 = vpop.f32.mrf.mxu0
    %v3086 = vadd.f32 %v3072, %v3085
    %3087 = vdwg.mxu0
    %v3088 = vpack.c.bf16 %v3084, %v3084
    %v3089 = vpack.c.bf16 %v3086, %v3086
    %v3092 = vrot.slane %v3088, 2
    %v3093 = vrot.slane %v3089, 2
    %vm3094 = vcmask 1041408
    %v3097 = vsel %vm3094, %v3088, %v3092
    %vm3098 = vcmask 1043458
    %v3099 = vsel %vm3098, %v3088, %v3092
    %v3101 = vrot.slane %v3099, 2
    %v3104 = vsel %vm3094, %v3089, %v3093
    %v3105 = vsel %vm3098, %v3089, %v3093
    %v3107 = vrot.slane %v3105, 2
    %3112 = vst [vmem:[#allocation7] sm:$0x3] %v3097
    %3113 = vst [vmem:[#allocation7 + $0x2] sm:$0x3] %v3101
    %3114 = vst [vmem:[#allocation7 + $0x4] sm:$0x3] %v3104
    %3115 = vst [vmem:[#allocation7 + $0x6] sm:$0x3] %v3107
    // Predicated region
    $region42: #{neural_network_forward.1} parent=1 // pred_check
      _
    $region43: #{neural_network_forward.1} parent=1 // pred_check_branch
      %3117 = sbr.rel (0) target = $region45
    $region44: #{neural_network_forward.1} parent=1 // pred_region
      // Predicated region
      $region46: #{neural_network_forward.1} parent=44 // pred_check
        _
      $region47: #{neural_network_forward.1} parent=44 // pred_check_branch
        %3119 = sbr.rel (0) target = $region49
      $region48: #{neural_network_forward.1} parent=44 // pred_region
        // Predicated region
        $region50: #{neural_network_forward.1} parent=48 // pred_check
          _
        $region51: #{neural_network_forward.1} parent=48 // pred_check_branch
          %3121 = sbr.rel target = $region53
        $region52: #{neural_network_forward.1} parent=48 // pred_region
          // Predicated region
          $region65: #{neural_network_forward.1} parent=52 // pred_check
            _
          $region66: #{neural_network_forward.1} parent=52 // pred_check_branch
            %3137 = sbr.rel (0) target = $region68
          $region67: #{neural_network_forward.1} parent=52 // pred_region
            %s3139 = ssub.s32 4, 1
            loop: start=0, step=1, limit=1
            $region69: #{neural_network_forward.1} parent=67 // loop_pre_header
              _
            $region70: #{neural_network_forward.1} parent=67 // loop_header
              %s3141 = sphi 0, %s3145
              %p3142 = scmp.ge.s32.totalorder %s3141, 1
              %s3146 = sphi [#allocation7], [#allocation7]
              %s3147 = sphi %s7, %s7
            $region71: #{neural_network_forward.1} parent=67 // loop_header_branch
              %3144 = sbr.rel (%p3142) target = $region75
            $region72: #{neural_network_forward.1} parent=67 // loop_body
              %v3148 = vld [vmem:[%s3146] sm:%s3139]
              %3149 = vst [vmem:[%s3147] sm:%s3139] %v3148
            $region73: #{neural_network_forward.1} parent=67 // loop_footer
              %s3145 = sadd.s32 1, %s3141
            $region74: #{neural_network_forward.1} parent=67 // loop_footer_branch
              %3140 = sbr.rel target = $region70
            $region75: #{neural_network_forward.1} parent=67 // loop_exit
              _
          $region68: #{neural_network_forward.1} parent=52 // pred_fallthru
            _
        $region53: #{neural_network_forward.1} parent=48 // pred_fallthru
          _
        // Predicated region
        $region54: #{neural_network_forward.1} parent=48 // pred_check
          _
        $region55: #{neural_network_forward.1} parent=48 // pred_check_branch
          %3123 = sbr.rel (0) target = $region57
        $region56: #{neural_network_forward.1} parent=48 // pred_region
          %s3125 = ssub.s32 4, 1
          loop: start=0, step=1, limit=1
          $region58: #{neural_network_forward.1} parent=56 // loop_pre_header
            _
          $region59: #{neural_network_forward.1} parent=56 // loop_header
            %s3127 = sphi 0, %s3131
            %p3128 = scmp.ge.s32.totalorder %s3127, 1
            %s3132 = sphi [#allocation7], [#allocation7]
            %s3133 = sphi %s7, %s7
          $region60: #{neural_network_forward.1} parent=56 // loop_header_branch
            %3130 = sbr.rel (%p3128) target = $region64
          $region61: #{neural_network_forward.1} parent=56 // loop_body
            %v3134 = vld [vmem:[%s3132] sm:%s3125]
            %3135 = vst [vmem:[%s3133] sm:%s3125] %v3134
          $region62: #{neural_network_forward.1} parent=56 // loop_footer
            %s3131 = sadd.s32 1, %s3127
          $region63: #{neural_network_forward.1} parent=56 // loop_footer_branch
            %3126 = sbr.rel target = $region59
          $region64: #{neural_network_forward.1} parent=56 // loop_exit
            _
        $region57: #{neural_network_forward.1} parent=48 // pred_fallthru
          _
      $region49: #{neural_network_forward.1} parent=44 // pred_fallthru
        _
      %3150 = vnop
    $region45: #{neural_network_forward.1} parent=1 // pred_fallthru
      _
    // Predicated region
    $region76: #{neural_network_forward.1} parent=1 // pred_check
      _
    $region77: #{neural_network_forward.1} parent=1 // pred_check_branch
      %3152 = sbr.rel (0) target = $region79
    $region78: #{neural_network_forward.1} parent=1 // pred_region
      _
    $region79: #{neural_network_forward.1} parent=1 // pred_fallthru
      _
    %3153 = vsyncpa [#allocation3], 1
    %3154 = vsyncpa [#allocation5], 1

</llo_original>
